<compile_context>
chip_gen: v5e
topology: v5e:2x2
jax: 0.10.0
libtpu: 0.0.40
codegen_flags: <defaults>
</compile_context>

<pallas_src>
import math

import jax
import jax.numpy as jnp
from jax.experimental import pallas as pl
from jax.experimental.pallas import tpu as pltpu

# ----------------------------- model sizes -----------------------------
B = 2                  # batch (trajectories)
T = 8                  # timesteps per trajectory (folded into the row dim)
C, Hs, Ws = 4, 16, 16
D_IN = C * Hs * Ws     # 1024 flattened input features
HID = 32               # hidden width
Z = 8                  # latent dim


def _round_up(n, m):
    return (n + m - 1) // m * m


# ------------------------------ kernel ---------------------------------
def _traj_vae_kernel(
    x_ref,      # (TM, D_IN)     f32   flattened inputs (row block)
    eps_ref,    # (TM, Z)        f32   reparameterization noise
    we1_ref,    # (D_IN, HID)    f32   encoder layer 1 (f32 for mu/logvar accuracy)
    wd2_ref,    # (HID, D_IN)    bf16  decoder layer 2 (wide MXU matmul)
    wsm_ref,    # (4, HID, HID)  f32   packed small weights (zero-padded full tiles)
    bs_ref,     # (8, 128)       f32   packed short biases
    bd2_ref,    # (1, D_IN)      f32   decoder output bias (lane-dense row)
    y_a_ref,    # (TM, D_IN)     f32   Y_a rows for this block
    y_b_ref,    # (TM, D_IN)     f32   Y_b rows for this block
    mulv_ref,   # (TM, 2Z)       f32   [mu | logvar]
    zab_ref,    # (2, TM, Z)     f32   [z_a ; z_b]
):
    tm = x_ref.shape[0]
    x = x_ref[...]
    eps = eps_ref[...]

    # packed short biases (one (8,128) tile)
    be1 = bs_ref[0:1, :HID]            # (1, HID)
    bmulv = bs_ref[1:2, :2 * Z]        # (1, 2Z)   [bmu | blv]
    bd1 = bs_ref[2:3, :HID]            # (1, HID)
    bdy1 = bs_ref[3:4, :HID]           # (1, HID)
    bdy2p = bs_ref[4:5, :HID]          # (1, HID)  bdy2 in lanes [0:Z], zeros beyond

    # ---- encoder (f32 MXU; elementwise f32) ----
    h = jnp.dot(x, we1_ref[...], preferred_element_type=jnp.float32) + be1
    h = jnp.maximum(h, 0.0)                                          # ReLU, (TM, HID)

    # ---- fused mu|logvar: full (HID,HID) tile, slice output columns ----
    mulv = jnp.dot(h, wsm_ref[0], preferred_element_type=jnp.float32)[:, :2 * Z] + bmulv
    mu = mulv[:, :Z]
    lv = mulv[:, Z:]

    # ---- reparameterization; zero-pad latent to HID lanes for full-tile dots ----
    z_a = mu + jnp.exp(0.5 * lv) * eps                               # (TM, Z)
    lane_pad = jnp.zeros((tm, HID - Z), jnp.float32)
    z_a_pad = jnp.concatenate([z_a, lane_pad], axis=1)               # (TM, HID)

    # ---- latent dynamics:  z_b = z_a + dyn(z_a) ----
    hdy = jnp.tanh(
        jnp.dot(z_a_pad, wsm_ref[2], preferred_element_type=jnp.float32) + bdy1)
    dz = jnp.dot(hdy, wsm_ref[3], preferred_element_type=jnp.float32) + bdy2p
    z_b_pad = z_a_pad + dz                                           # lanes >= Z stay 0

    # ---- fused decoder over the sublane-stacked [z_a ; z_b] (one wide matmul) ----
    z_both = jnp.concatenate([z_a_pad, z_b_pad], axis=0)             # (2TM, HID)
    hd = jnp.maximum(
        jnp.dot(z_both, wsm_ref[1], preferred_element_type=jnp.float32) + bd1, 0.0)
    logits = jnp.dot(hd.astype(jnp.bfloat16), wd2_ref[...],
                     preferred_element_type=jnp.float32) + bd2_ref[...]
    y = 0.5 * jnp.tanh(0.5 * logits) + 0.5                           # sigmoid via EUP tanh

    # ---- lane-dense outputs ----
    y_a_ref[...] = y[:tm]
    y_b_ref[...] = y[tm:]
    mulv_ref[...] = mulv
    zab_ref[0] = z_a
    zab_ref[1] = z_b_pad[:, :Z]


# ------------------------------ wrapper ---------------------------------
def trajectory_vae_forward(X, packed, eps, *, tm=256):
    """X = (X_a, X_b); X_a shape (..., C, H, W).  Returns the 6-tuple."""
    X_a, _X_b = X  # X_b is unused, matching the reference forward
    lead = X_a.shape[:-3]                                   # e.g. (B, T)
    x_flat = X_a.reshape(-1, D_IN).astype(jnp.float32)      # (R, D_IN)
    eps_flat = eps.reshape(-1, Z).astype(jnp.float32)       # (R, Z)
    R = x_flat.shape[0]

    # Row tile: multiple of 8 sublanes, capped so double-buffered x/Y tiles fit
    # v5e's 16 MiB scoped-VMEM default (and v7x's 64 MiB physical VMEM).
    tm = _round_up(max(8, min(tm, _round_up(R, 8))), 8)
    r_pad = _round_up(R, tm)
    if r_pad != R:
        x_flat = jnp.pad(x_flat, ((0, r_pad - R), (0, 0)))
        eps_flat = jnp.pad(eps_flat, ((0, r_pad - R), (0, 0)))
    grid = (r_pad // tm,)

    operands = (x_flat, eps_flat, packed["we1"], packed["wd2"],
                packed["w_small"], packed["b_small"], packed["bd2"])

    out_shapes = (
        jax.ShapeDtypeStruct((r_pad, D_IN), jnp.float32),   # Y_a
        jax.ShapeDtypeStruct((r_pad, D_IN), jnp.float32),   # Y_b
        jax.ShapeDtypeStruct((r_pad, 2 * Z), jnp.float32),  # [mu | logvar]
        jax.ShapeDtypeStruct((2, r_pad, Z), jnp.float32),   # [z_a ; z_b]
    )

    in_specs = [
        pl.BlockSpec((tm, D_IN), lambda i: (i, 0)),         # x (row block)
        pl.BlockSpec((tm, Z), lambda i: (i, 0)),            # eps (row block)
        pl.BlockSpec((D_IN, HID), lambda i: (0, 0)),        # we1 (VMEM-resident)
        pl.BlockSpec((HID, D_IN), lambda i: (0, 0)),        # wd2 (VMEM-resident)
        pl.BlockSpec((4, HID, HID), lambda i: (0, 0, 0)),   # packed small weights
        pl.BlockSpec((8, 128), lambda i: (0, 0)),           # packed short biases
        pl.BlockSpec((1, D_IN), lambda i: (0, 0)),          # bd2
    ]
    out_specs = (
        pl.BlockSpec((tm, D_IN), lambda i: (i, 0)),
        pl.BlockSpec((tm, D_IN), lambda i: (i, 0)),
        pl.BlockSpec((tm, 2 * Z), lambda i: (i, 0)),
        pl.BlockSpec((2, tm, Z), lambda i: (0, i, 0)),
    )

    # Advisory cost estimate (Python-int arithmetic only; no device ops).
    flops = (2 * r_pad * (D_IN * HID + 3 * HID * HID)       # enc + mu|lv + dyn1 + dyn2
             + 2 * (2 * r_pad) * (HID * HID + HID * D_IN))  # fused decoder (both z's)
    transcendentals = r_pad * Z + r_pad * HID + 2 * r_pad * D_IN
    bytes_in = sum(int(a.size) * a.dtype.itemsize for a in operands)
    bytes_out = sum(math.prod(s.shape) * jnp.dtype(s.dtype).itemsize for s in out_shapes)

    fn = pl.pallas_call(
        _traj_vae_kernel,
        out_shape=out_shapes,
        grid_spec=pltpu.PrefetchScalarGridSpec(
            num_scalar_prefetch=0,
            grid=grid,
            in_specs=in_specs,
            out_specs=out_specs,
        ),
        compiler_params=pltpu.CompilerParams(
            dimension_semantics=("parallel",)),
        cost_estimate=pl.CostEstimate(
            flops=flops, transcendentals=transcendentals,
            bytes_accessed=bytes_in + bytes_out),
    )
    y_a, y_b, mulv, zab = fn(*operands)

    Y_a = y_a[:R].reshape(*lead, D_IN)
    Y_b = y_b[:R].reshape(*lead, D_IN)
    mu_a = mulv[:R, :Z].reshape(*lead, Z)
    logvar_a = mulv[:R, Z:].reshape(*lead, Z)
    z_a = zab[0, :R].reshape(*lead, Z)
    z_b = zab[1, :R].reshape(*lead, Z)
    return Y_a, mu_a, logvar_a, z_a, Y_b, z_b


# ---------------------------- parameters --------------------------------
def init_params(key):
    """Deterministic synthetic per-layer parameters (no checkpoint loading)."""
    ks = jax.random.split(key, 7)

    def lin(k, fan_in, fan_out):
        w = jax.random.normal(k, (fan_in, fan_out), jnp.float32) / jnp.sqrt(fan_in)
        b = jnp.zeros((fan_out,), jnp.float32)
        return w, b

    we1, be1 = lin(ks[0], D_IN, HID)
    wmu, bmu = lin(ks[1], HID, Z)
    wlv, blv = lin(ks[2], HID, Z)
    wd1, bd1 = lin(ks[3], Z, HID)
    wd2, bd2 = lin(ks[4], HID, D_IN)
    wdy1, bdy1 = lin(ks[5], Z, HID)
    wdy2, bdy2 = lin(ks[6], HID, Z)
    return dict(we1=we1, be1=be1, wmu=wmu, bmu=bmu, wlv=wlv, blv=blv,
                wd1=wd1, bd1=bd1, wd2=wd2, bd2=bd2,
                wdy1=wdy1, bdy1=bdy1, wdy2=wdy2, bdy2=bdy2)


def pack_params(raw):
    """Pack per-layer params into the consolidated kernel operands (host-side, once)."""
    we1 = raw["we1"].astype(jnp.float32)     # f32 encoder weight (mu/logvar accuracy)
    wd2 = raw["wd2"].astype(jnp.bfloat16)    # bf16 input to the wide decoder matmul

    # zero-padded full (HID, HID) tiles — correctness of the full-tile dots relies
    # on this padding staying zero.
    w_small = jnp.zeros((4, HID, HID), jnp.float32)
    w_small = w_small.at[0, :, :2 * Z].set(
        jnp.concatenate([raw["wmu"], raw["wlv"]], axis=1))   # fused mu|logvar
    w_small = w_small.at[1, :Z, :].set(raw["wd1"])
    w_small = w_small.at[2, :Z, :].set(raw["wdy1"])
    w_small = w_small.at[3, :, :Z].set(raw["wdy2"])

    b_small = jnp.zeros((8, 128), jnp.float32)
    b_small = b_small.at[0, :HID].set(raw["be1"])
    b_small = b_small.at[1, :2 * Z].set(jnp.concatenate([raw["bmu"], raw["blv"]]))
    b_small = b_small.at[2, :HID].set(raw["bd1"])
    b_small = b_small.at[3, :HID].set(raw["bdy1"])
    b_small = b_small.at[4, :Z].set(raw["bdy2"])

    bd2 = raw["bd2"].reshape(1, D_IN).astype(jnp.float32)
    return dict(we1=we1, wd2=wd2, w_small=w_small, b_small=b_small, bd2=bd2)


# --------------------------- pure-JAX reference --------------------------
def reference_forward(X, raw, eps):
    X_a, _ = X
    lead = X_a.shape[:-3]
    x = X_a.reshape(-1, D_IN)
    e = eps.reshape(-1, Z)
    hp = jax.lax.Precision.HIGHEST

    h = jax.nn.relu(jnp.dot(x, raw["we1"], precision=hp) + raw["be1"])
    mu = jnp.dot(h, raw["wmu"], precision=hp) + raw["bmu"]
    lv = jnp.dot(h, raw["wlv"], precision=hp) + raw["blv"]
    z_a = mu + jnp.exp(0.5 * lv) * e

    def dec(z):
        hd = jax.nn.relu(jnp.dot(z, raw["wd1"], precision=hp) + raw["bd1"])
        return jax.nn.sigmoid(jnp.dot(hd, raw["wd2"], precision=hp) + raw["bd2"])

    y_a = dec(z_a)
    z_b = z_a + (jnp.dot(jnp.tanh(jnp.dot(z_a, raw["wdy1"], precision=hp) + raw["bdy1"]),
                         raw["wdy2"], precision=hp) + raw["bdy2"])
    y_b = dec(z_b)
    return (y_a.reshape(*lead, D_IN), mu.reshape(*lead, Z), lv.reshape(*lead, Z),
            z_a.reshape(*lead, Z), y_b.reshape(*lead, D_IN), z_b.reshape(*lead, Z))


if __name__ == "__main__":
    key = jax.random.PRNGKey(0)
    k_xa, k_xb, k_eps, k_par = jax.random.split(key, 4)

    # A small trajectory: batch=2, seq=8 timesteps, 4x16x16 frames.
    X_a = jax.random.normal(k_xa, (B, T, C, Hs, Ws), jnp.float32)
    X_b = jax.random.normal(k_xb, (B, T, C, Hs, Ws), jnp.float32)  # unused by forward
    eps = jax.random.normal(k_eps, (B, T, Z), jnp.float32)         # reparam noise

    raw = init_params(k_par)
    packed = pack_params(raw)    # hoisted outside the jitted forward

    fwd = jax.jit(trajectory_vae_forward, static_argnames=("tm",))
    # tm=8 keeps a 2-step grid at this tiny demo size (exercises the pipelined
    # row-block path); production sizes use the default tm=256.
    outs = jax.block_until_ready(fwd((X_a, X_b), packed, eps, tm=8))

    Y_a, mu_a, logvar_a, z_a, Y_b, z_b = outs
    assert Y_a.shape == (B, T, D_IN) and Y_b.shape == (B, T, D_IN)
    assert mu_a.shape == (B, T, Z) and logvar_a.shape == (B, T, Z)
    assert z_a.shape == (B, T, Z) and z_b.shape == (B, T, Z)

    refs = reference_forward((X_a, X_b), raw, eps)
    # Latents are f32 end-to-end (tight); Y goes through one bf16 MXU matmul (loose).
    tols = (2e-2, 5e-3, 5e-3, 5e-3, 2e-2, 5e-3)
    for got, want, tol in zip(outs, refs, tols):
        assert got.shape == want.shape
        err = float(jnp.max(jnp.abs(got - want)))
        assert err <= tol, (got.shape, err)

    print("KERNEL_OK")
</pallas_src>

<mosaic_0001>
module attributes {stable_mosaic.version = 11 : i64} {
  func.func @_traj_vae_kernel(%arg0: i32, %arg1: memref<8x1024xf32, #tpu.memory_space<vmem>>, %arg2: memref<8x8xf32, #tpu.memory_space<vmem>>, %arg3: memref<1024x32xf32, #tpu.memory_space<vmem>>, %arg4: memref<32x1024xbf16, #tpu.memory_space<vmem>>, %arg5: memref<4x32x32xf32, #tpu.memory_space<vmem>>, %arg6: memref<8x128xf32, #tpu.memory_space<vmem>>, %arg7: memref<1x1024xf32, #tpu.memory_space<vmem>>, %arg8: memref<8x1024xf32, #tpu.memory_space<vmem>>, %arg9: memref<8x1024xf32, #tpu.memory_space<vmem>>, %arg10: memref<8x16xf32, #tpu.memory_space<vmem>>, %arg11: memref<2x8x8xf32, #tpu.memory_space<vmem>>) attributes {dimension_semantics = [#tpu.dimension_semantics<parallel>], iteration_bounds = array<i64: 2>, scalar_prefetch = 0 : i64, scratch_operands = 0 : i64, tpu.core_type = #tpu.core_type<tc>, window_params = [{transform_indices = @transform_0, window_bounds = array<i64: 8, 1024>}, {transform_indices = @transform_1, window_bounds = array<i64: 8, 8>}, {pipeline_mode = #tpu.pipeline_mode<synchronous>, transform_indices = @transform_2, window_bounds = array<i64: 1024, 32>}, {pipeline_mode = #tpu.pipeline_mode<synchronous>, transform_indices = @transform_3, window_bounds = array<i64: 32, 1024>}, {pipeline_mode = #tpu.pipeline_mode<synchronous>, transform_indices = @transform_4, window_bounds = array<i64: 4, 32, 32>}, {pipeline_mode = #tpu.pipeline_mode<synchronous>, transform_indices = @transform_5, window_bounds = array<i64: 8, 128>}, {pipeline_mode = #tpu.pipeline_mode<synchronous>, transform_indices = @transform_6, window_bounds = array<i64: 1, 1024>}, {transform_indices = @transform_7, window_bounds = array<i64: 8, 1024>}, {transform_indices = @transform_8, window_bounds = array<i64: 8, 1024>}, {transform_indices = @transform_9, window_bounds = array<i64: 8, 16>}, {transform_indices = @transform_10, window_bounds = array<i64: 2, 8, 8>}]} {
    %c0 = arith.constant 0 : index
    %c0_0 = arith.constant 0 : index
    %0 = vector.load %arg1[%c0, %c0_0] : memref<8x1024xf32, #tpu.memory_space<vmem>>, vector<8x1024xf32>
    %c0_1 = arith.constant 0 : index
    %c0_2 = arith.constant 0 : index
    %1 = vector.load %arg2[%c0_1, %c0_2] : memref<8x8xf32, #tpu.memory_space<vmem>>, vector<8x8xf32>
    %c0_3 = arith.constant 0 : index
    %c0_4 = arith.constant 0 : index
    %2 = vector.load %arg6[%c0_3, %c0_4] : memref<8x128xf32, #tpu.memory_space<vmem>>, vector<1x32xf32>
    %c1 = arith.constant 1 : index
    %c0_5 = arith.constant 0 : index
    %3 = vector.load %arg6[%c1, %c0_5] : memref<8x128xf32, #tpu.memory_space<vmem>>, vector<1x16xf32>
    %c2 = arith.constant 2 : index
    %c0_6 = arith.constant 0 : index
    %4 = vector.load %arg6[%c2, %c0_6] : memref<8x128xf32, #tpu.memory_space<vmem>>, vector<1x32xf32>
    %c3 = arith.constant 3 : index
    %c0_7 = arith.constant 0 : index
    %5 = vector.load %arg6[%c3, %c0_7] : memref<8x128xf32, #tpu.memory_space<vmem>>, vector<1x32xf32>
    %c4 = arith.constant 4 : index
    %c0_8 = arith.constant 0 : index
    %6 = vector.load %arg6[%c4, %c0_8] : memref<8x128xf32, #tpu.memory_space<vmem>>, vector<1x32xf32>
    %c0_9 = arith.constant 0 : index
    %c0_10 = arith.constant 0 : index
    %7 = vector.load %arg3[%c0_9, %c0_10] : memref<1024x32xf32, #tpu.memory_space<vmem>>, vector<1024x32xf32>
    %cst = arith.constant dense<0.000000e+00> : vector<8x32xf32>
    %8 = tpu.matmul %0, %7, %cst {dimension_numbers = #tpu.dot_dimension_numbers<[1], [0], [0], [1], [0, 0, 1, 1], [], []>} : vector<8x1024xf32>, vector<1024x32xf32>, vector<8x32xf32> -> vector<8x32xf32>
    %9 = vector.broadcast %2 : vector<1x32xf32> to vector<8x32xf32>
    %10 = arith.addf %8, %9 : vector<8x32xf32>
    %cst_11 = arith.constant 0.000000e+00 : f32
    %11 = vector.broadcast %cst_11 : f32 to vector<8x32xf32>
    %12 = arith.maximumf %10, %11 : vector<8x32xf32>
    %c0_12 = arith.constant 0 : index
    %c0_13 = arith.constant 0 : index
    %c0_14 = arith.constant 0 : index
    %13 = vector.load %arg5[%c0_12, %c0_13, %c0_14] : memref<4x32x32xf32, #tpu.memory_space<vmem>>, vector<1x32x32xf32>
    %14 = vector.shape_cast %13 : vector<1x32x32xf32> to vector<32x32xf32>
    %cst_15 = arith.constant dense<0.000000e+00> : vector<8x32xf32>
    %15 = tpu.matmul %12, %14, %cst_15 {dimension_numbers = #tpu.dot_dimension_numbers<[1], [0], [0], [1], [0, 0, 1, 1], [], []>} : vector<8x32xf32>, vector<32x32xf32>, vector<8x32xf32> -> vector<8x32xf32>
    %16 = vector.extract_strided_slice %15 {offsets = [0, 0], sizes = [8, 16], strides = [1, 1]} : vector<8x32xf32> to vector<8x16xf32>
    %17 = vector.broadcast %3 : vector<1x16xf32> to vector<8x16xf32>
    %18 = arith.addf %16, %17 : vector<8x16xf32>
    %19 = vector.extract_strided_slice %18 {offsets = [0, 0], sizes = [8, 8], strides = [1, 1]} : vector<8x16xf32> to vector<8x8xf32>
    %20 = vector.extract_strided_slice %18 {offsets = [0, 8], sizes = [8, 8], strides = [1, 1]} : vector<8x16xf32> to vector<8x8xf32>
    %cst_16 = arith.constant 5.000000e-01 : f32
    %21 = vector.broadcast %cst_16 : f32 to vector<8x8xf32>
    %22 = arith.mulf %21, %20 : vector<8x8xf32>
    %23 = math.exp %22 : vector<8x8xf32>
    %24 = arith.mulf %23, %1 : vector<8x8xf32>
    %25 = arith.addf %19, %24 : vector<8x8xf32>
    %cst_17 = arith.constant 0.000000e+00 : f32
    %26 = vector.broadcast %cst_17 : f32 to vector<8x24xf32>
    %27 = tpu.concatenate %25, %26 in 1 : vector<8x8xf32>, vector<8x24xf32> -> vector<8x32xf32>
    %c2_18 = arith.constant 2 : index
    %c0_19 = arith.constant 0 : index
    %c0_20 = arith.constant 0 : index
    %28 = vector.load %arg5[%c2_18, %c0_19, %c0_20] : memref<4x32x32xf32, #tpu.memory_space<vmem>>, vector<1x32x32xf32>
    %29 = vector.shape_cast %28 : vector<1x32x32xf32> to vector<32x32xf32>
    %cst_21 = arith.constant dense<0.000000e+00> : vector<8x32xf32>
    %30 = tpu.matmul %27, %29, %cst_21 {dimension_numbers = #tpu.dot_dimension_numbers<[1], [0], [0], [1], [0, 0, 1, 1], [], []>} : vector<8x32xf32>, vector<32x32xf32>, vector<8x32xf32> -> vector<8x32xf32>
    %31 = vector.broadcast %5 : vector<1x32xf32> to vector<8x32xf32>
    %32 = arith.addf %30, %31 : vector<8x32xf32>
    %33 = math.tanh %32 : vector<8x32xf32>
    %c3_22 = arith.constant 3 : index
    %c0_23 = arith.constant 0 : index
    %c0_24 = arith.constant 0 : index
    %34 = vector.load %arg5[%c3_22, %c0_23, %c0_24] : memref<4x32x32xf32, #tpu.memory_space<vmem>>, vector<1x32x32xf32>
    %35 = vector.shape_cast %34 : vector<1x32x32xf32> to vector<32x32xf32>
    %cst_25 = arith.constant dense<0.000000e+00> : vector<8x32xf32>
    %36 = tpu.matmul %33, %35, %cst_25 {dimension_numbers = #tpu.dot_dimension_numbers<[1], [0], [0], [1], [0, 0, 1, 1], [], []>} : vector<8x32xf32>, vector<32x32xf32>, vector<8x32xf32> -> vector<8x32xf32>
    %37 = vector.broadcast %6 : vector<1x32xf32> to vector<8x32xf32>
    %38 = arith.addf %36, %37 : vector<8x32xf32>
    %39 = arith.addf %27, %38 : vector<8x32xf32>
    %40 = tpu.concatenate %27, %39 in 0 : vector<8x32xf32>, vector<8x32xf32> -> vector<16x32xf32>
    %c1_26 = arith.constant 1 : index
    %c0_27 = arith.constant 0 : index
    %c0_28 = arith.constant 0 : index
    %41 = vector.load %arg5[%c1_26, %c0_27, %c0_28] : memref<4x32x32xf32, #tpu.memory_space<vmem>>, vector<1x32x32xf32>
    %42 = vector.shape_cast %41 : vector<1x32x32xf32> to vector<32x32xf32>
    %cst_29 = arith.constant dense<0.000000e+00> : vector<16x32xf32>
    %43 = tpu.matmul %40, %42, %cst_29 {dimension_numbers = #tpu.dot_dimension_numbers<[1], [0], [0], [1], [0, 0, 1, 1], [], []>} : vector<16x32xf32>, vector<32x32xf32>, vector<16x32xf32> -> vector<16x32xf32>
    %44 = vector.broadcast %4 : vector<1x32xf32> to vector<16x32xf32>
    %45 = arith.addf %43, %44 : vector<16x32xf32>
    %cst_30 = arith.constant 0.000000e+00 : f32
    %46 = vector.broadcast %cst_30 : f32 to vector<16x32xf32>
    %47 = arith.maximumf %45, %46 : vector<16x32xf32>
    %48 = arith.truncf %47 : vector<16x32xf32> to vector<16x32xbf16>
    %c0_31 = arith.constant 0 : index
    %c0_32 = arith.constant 0 : index
    %49 = vector.load %arg4[%c0_31, %c0_32] : memref<32x1024xbf16, #tpu.memory_space<vmem>>, vector<32x1024xbf16>
    %cst_33 = arith.constant dense<0.000000e+00> : vector<16x1024xf32>
    %50 = tpu.matmul %48, %49, %cst_33 {dimension_numbers = #tpu.dot_dimension_numbers<[1], [0], [0], [1], [0, 0, 1, 1], [], []>} : vector<16x32xbf16>, vector<32x1024xbf16>, vector<16x1024xf32> -> vector<16x1024xf32>
    %c0_34 = arith.constant 0 : index
    %c0_35 = arith.constant 0 : index
    %51 = vector.load %arg7[%c0_34, %c0_35] : memref<1x1024xf32, #tpu.memory_space<vmem>>, vector<1x1024xf32>
    %52 = vector.broadcast %51 : vector<1x1024xf32> to vector<16x1024xf32>
    %53 = arith.addf %50, %52 : vector<16x1024xf32>
    %cst_36 = arith.constant 5.000000e-01 : f32
    %54 = vector.broadcast %cst_36 : f32 to vector<16x1024xf32>
    %55 = arith.mulf %54, %53 : vector<16x1024xf32>
    %56 = math.tanh %55 : vector<16x1024xf32>
    %cst_37 = arith.constant 5.000000e-01 : f32
    %57 = vector.broadcast %cst_37 : f32 to vector<16x1024xf32>
    %58 = arith.mulf %57, %56 : vector<16x1024xf32>
    %cst_38 = arith.constant 5.000000e-01 : f32
    %59 = vector.broadcast %cst_38 : f32 to vector<16x1024xf32>
    %60 = arith.addf %58, %59 : vector<16x1024xf32>
    %61 = vector.extract_strided_slice %60 {offsets = [0, 0], sizes = [8, 1024], strides = [1, 1]} : vector<16x1024xf32> to vector<8x1024xf32>
    %c0_39 = arith.constant 0 : index
    %c0_40 = arith.constant 0 : index
    %62 = vector.load %arg8[%c0_39, %c0_40] : memref<8x1024xf32, #tpu.memory_space<vmem>>, vector<8x1024xf32>
    tpu.vector_store %arg8[%c0_39, %c0_40], %61 {strides = array<i32>} : memref<8x1024xf32, #tpu.memory_space<vmem>>, vector<8x1024xf32>,
    %63 = vector.extract_strided_slice %60 {offsets = [8, 0], sizes = [8, 1024], strides = [1, 1]} : vector<16x1024xf32> to vector<8x1024xf32>
    %c0_41 = arith.constant 0 : index
    %c0_42 = arith.constant 0 : index
    %64 = vector.load %arg9[%c0_41, %c0_42] : memref<8x1024xf32, #tpu.memory_space<vmem>>, vector<8x1024xf32>
    tpu.vector_store %arg9[%c0_41, %c0_42], %63 {strides = array<i32>} : memref<8x1024xf32, #tpu.memory_space<vmem>>, vector<8x1024xf32>,
    %c0_43 = arith.constant 0 : index
    %c0_44 = arith.constant 0 : index
    %65 = vector.load %arg10[%c0_43, %c0_44] : memref<8x16xf32, #tpu.memory_space<vmem>>, vector<8x16xf32>
    tpu.vector_store %arg10[%c0_43, %c0_44], %18 {strides = array<i32>} : memref<8x16xf32, #tpu.memory_space<vmem>>, vector<8x16xf32>,
    %c0_45 = arith.constant 0 : index
    %c0_46 = arith.constant 0 : index
    %c0_47 = arith.constant 0 : index
    %66 = vector.load %arg11[%c0_45, %c0_46, %c0_47] : memref<2x8x8xf32, #tpu.memory_space<vmem>>, vector<1x8x8xf32>
    %67 = vector.shape_cast %66 : vector<1x8x8xf32> to vector<8x8xf32>
    %68 = vector.shape_cast %25 : vector<8x8xf32> to vector<1x8x8xf32>
    tpu.vector_store %arg11[%c0_45, %c0_46, %c0_47], %68 {strides = array<i32>} : memref<2x8x8xf32, #tpu.memory_space<vmem>>, vector<1x8x8xf32>,
    %69 = vector.extract_strided_slice %39 {offsets = [0, 0], sizes = [8, 8], strides = [1, 1]} : vector<8x32xf32> to vector<8x8xf32>
    %c1_48 = arith.constant 1 : index
    %c0_49 = arith.constant 0 : index
    %c0_50 = arith.constant 0 : index
    %70 = vector.load %arg11[%c1_48, %c0_49, %c0_50] : memref<2x8x8xf32, #tpu.memory_space<vmem>>, vector<1x8x8xf32>
    %71 = vector.shape_cast %70 : vector<1x8x8xf32> to vector<8x8xf32>
    %72 = vector.shape_cast %69 : vector<8x8xf32> to vector<1x8x8xf32>
    tpu.vector_store %arg11[%c1_48, %c0_49, %c0_50], %72 {strides = array<i32>} : memref<2x8x8xf32, #tpu.memory_space<vmem>>, vector<1x8x8xf32>,
    return
  }
  func.func @transform_0(%arg0: i32) -> (i32, i32) {
    %c0_i32 = arith.constant 0 : i32
    %c0_i32_0 = arith.constant 0 : i32
    return %arg0, %c0_i32 : i32, i32
  }
  func.func @transform_1(%arg0: i32) -> (i32, i32) {
    %c0_i32 = arith.constant 0 : i32
    %c0_i32_0 = arith.constant 0 : i32
    return %arg0, %c0_i32 : i32, i32
  }
  func.func @transform_2(%arg0: i32) -> (i32, i32) {
    %c0_i32 = arith.constant 0 : i32
    %c0_i32_0 = arith.constant 0 : i32
    %c0_i32_1 = arith.constant 0 : i32
    return %c0_i32, %c0_i32_0 : i32, i32
  }
  func.func @transform_3(%arg0: i32) -> (i32, i32) {
    %c0_i32 = arith.constant 0 : i32
    %c0_i32_0 = arith.constant 0 : i32
    %c0_i32_1 = arith.constant 0 : i32
    return %c0_i32, %c0_i32_0 : i32, i32
  }
  func.func @transform_4(%arg0: i32) -> (i32, i32, i32) {
    %c0_i32 = arith.constant 0 : i32
    %c0_i32_0 = arith.constant 0 : i32
    %c0_i32_1 = arith.constant 0 : i32
    %c0_i32_2 = arith.constant 0 : i32
    return %c0_i32, %c0_i32_0, %c0_i32_1 : i32, i32, i32
  }
  func.func @transform_5(%arg0: i32) -> (i32, i32) {
    %c0_i32 = arith.constant 0 : i32
    %c0_i32_0 = arith.constant 0 : i32
    %c0_i32_1 = arith.constant 0 : i32
    return %c0_i32, %c0_i32_0 : i32, i32
  }
  func.func @transform_6(%arg0: i32) -> (i32, i32) {
    %c0_i32 = arith.constant 0 : i32
    %c0_i32_0 = arith.constant 0 : i32
    %c0_i32_1 = arith.constant 0 : i32
    return %c0_i32, %c0_i32_0 : i32, i32
  }
  func.func @transform_7(%arg0: i32) -> (i32, i32) {
    %c0_i32 = arith.constant 0 : i32
    %c0_i32_0 = arith.constant 0 : i32
    return %arg0, %c0_i32 : i32, i32
  }
  func.func @transform_8(%arg0: i32) -> (i32, i32) {
    %c0_i32 = arith.constant 0 : i32
    %c0_i32_0 = arith.constant 0 : i32
    return %arg0, %c0_i32 : i32, i32
  }
  func.func @transform_9(%arg0: i32) -> (i32, i32) {
    %c0_i32 = arith.constant 0 : i32
    %c0_i32_0 = arith.constant 0 : i32
    return %arg0, %c0_i32 : i32, i32
  }
  func.func @transform_10(%arg0: i32) -> (i32, i32, i32) {
    %c0_i32 = arith.constant 0 : i32
    %c0_i32_0 = arith.constant 0 : i32
    %c0_i32_1 = arith.constant 0 : i32
    return %c0_i32, %arg0, %c0_i32_0 : i32, i32, i32
  }
}

</mosaic_0001>

<llo_original>
// kernel: trajectory_vae_forward.1
$region0: #{trajectory_vae_forward.1}
  #allocation0 [shape = 'u32[]', space=smem, size = 0x4, offset = 0x4, fixed_abs, tag = 'smem constant byte address 0x4 - core index']
  #allocation1 [shape = 'u32[72,128]{1,0:T(1,128)}', space=vmem, size = 0x9000, scoped, tag = 'internal scratch']
  %s0 = inlined_call_operand.vmem [shape: f32[16,1024], index: 0, kind: input, shape index: {}]
  %s1 = inlined_call_operand.vmem [shape: f32[16,8], index: 1, kind: input, shape index: {}]
  %s2 = inlined_call_operand.vmem [shape: f32[1024,32], index: 2, kind: input, shape index: {}]
  %s3 = inlined_call_operand.vmem [shape: bf16[32,1024], index: 3, kind: input, shape index: {}]
  %s4 = inlined_call_operand.vmem [shape: f32[4,32,32], index: 4, kind: input, shape index: {}]
  %s5 = inlined_call_operand.vmem [shape: f32[8,128], index: 5, kind: input, shape index: {}]
  %s6 = inlined_call_operand.vmem [shape: f32[1,1024], index: 6, kind: input, shape index: {}]
  %s7 = inlined_call_operand.hbm [shape: f32[16,1024], index: 7, kind: output, shape index: {0}]
  %s8 = inlined_call_operand.hbm [shape: f32[16,1024], index: 8, kind: output, shape index: {1}]
  %s9 = inlined_call_operand.vmem [shape: f32[16,16], index: 9, kind: output, shape index: {2}]
  %s10 = inlined_call_operand.vmem [shape: f32[2,16,8], index: 10, kind: output, shape index: {3}]
  %11 = xla_tuple %s7, %s8, %s9, %s10
  %s12 = sld [smem:[#allocation0]]
  $region119: #{trajectory_vae_forward.1} parent=0
    _
  %s14 = ssub.s32 1, %s12
  %s15 = scalar_select 0, %s14, %s12
  $region1: #{trajectory_vae_forward.1} parent=0
    #allocation2 [shape = 'u8[65536]{0}', space=vmem, size = 0x10000, scoped, tag = 'output window, operand 0']
    #allocation3 [shape = 's32[2]{0}', space=sflag, size = 0x8, scoped, tag = 'scoped memory for trajectory_vae_forward.1']
    #allocation4 [shape = 'u8[65536]{0}', space=vmem, size = 0x10000, scoped, tag = 'output window, operand 1']
    #allocation5 [shape = 's32[2]{0}', space=sflag, size = 0x8, scoped, tag = 'scoped memory for trajectory_vae_forward.1']
    #allocation6 [shape = 'u8[16384]{0}', space=vmem, size = 0x4000, scoped, tag = 'output window, operand 3']
    %16 = vsyncpa [#allocation3], 0
    %s17 = scalar_lea.sflag [#allocation3], 1
    %18 = vsyncpa %s17, 0
    %19 = vsyncpa [#allocation5], 0
    %s20 = scalar_lea.sflag [#allocation5], 1
    %21 = vsyncpa %s20, 0
    loop: start=0, step=1, limit=4
    $region2: #{trajectory_vae_forward.1} parent=1 // loop_pre_header
      _
    $region3: #{trajectory_vae_forward.1} parent=1 // loop_header
      %s23 = sphi 0, %s27
      %p24 = scmp.ge.s32.totalorder %s23, 4
      %s33 = sphi 0, %s35
      %s36 = sphi 0, %s33
      %s37 = sphi 0, %s36
      %s53 = sphi 0, %s37
      %s59 = sphi 0, %s61
      %s62 = sphi 0, %s59
      %s63 = sphi 0, %s62
      %s79 = sphi 0, %s63
      %s83 = sphi 0, %s83
      %s85 = sphi 0, %s83
      %s86 = sphi 0, %s85
      %s100 = sphi 0, %s86
      %s104 = sphi 0, %s104
      %s106 = sphi 0, %s104
      %s107 = sphi 0, %s106
      %s121 = sphi 0, %s107
      %s125 = sphi 0, %s125
      %s127 = sphi 0, %s125
      %s128 = sphi 0, %s127
      %s142 = sphi 0, %s128
      %s146 = sphi 0, %s146
      %s148 = sphi 0, %s146
      %s149 = sphi 0, %s148
      %s163 = sphi 0, %s149
      %s167 = sphi 0, %s167
      %s169 = sphi 0, %s167
      %s170 = sphi 0, %s169
      %s184 = sphi 0, %s170
      %s190 = sphi 0, %s192
      %s193 = sphi 0, %s190
      %s194 = sphi 0, %s193
      %s210 = sphi 0, %s194
      %s216 = sphi 0, %s218
      %s219 = sphi 0, %s216
      %s220 = sphi 0, %s219
      %s236 = sphi 0, %s220
      %s242 = sphi 0, %s244
      %s245 = sphi 0, %s242
      %s246 = sphi 0, %s245
      %s262 = sphi 0, %s246
      %s268 = sphi 0, %s270
      %s271 = sphi 0, %s268
      %s272 = sphi 0, %s271
      %s288 = sphi 0, %s272
    $region4: #{trajectory_vae_forward.1} parent=1 // loop_header_branch
      %26 = sbr.rel (%p24) target = $region8
    $region5: #{trajectory_vae_forward.1} parent=1 // loop_body
      %s28 = ssub.s32 %s23, 1
      %s29 = ssub.s32 %s23, 2
      %s30 = sadd.s32 %s23, 1
      %s31 = ssub.s32 %s23, %s30
      %p32 = scmp.eq.s32.totalorder %s31, 0
      %s34 = sadd.s32 %s33, 1
      %s35 = scalar_select %p32, %s33, %s34
      %p38 = pneg %p32
      %p39 = scmp.eq.s32.totalorder %s23, 1
      %p40 = por %p38, %p39
      %p41 = scmp.ne.s32.totalorder %s33, %s36
      %p42 = scmp.eq.s32.totalorder %s23, 0
      %p43 = por %p41, %p42
      %p44 = scmp.ne.s32.totalorder %s33, %s36
      %p45 = scmp.eq.s32.totalorder %s28, 1
      %p46 = por %p44, %p45
      %p47 = scmp.ne.s32.totalorder %s36, %s37
      %p48 = scmp.eq.s32.totalorder %s28, 0
      %p49 = por %p47, %p48
      %p50 = scmp.ne.s32.totalorder %s36, %s37
      %p51 = scmp.eq.s32.totalorder %s29, 1
      %p52 = por %p50, %p51
      %p54 = scmp.ne.s32.totalorder %s37, %s53
      %p55 = scmp.eq.s32.totalorder %s29, 0
      %p56 = por %p54, %p55
      %s57 = ssub.s32 %s23, %s30
      %p58 = scmp.eq.s32.totalorder %s57, 0
      %s60 = sadd.s32 %s59, 1
      %s61 = scalar_select %p58, %s59, %s60
      %p64 = pneg %p58
      %p65 = scmp.eq.s32.totalorder %s23, 1
      %p66 = por %p64, %p65
      %p67 = scmp.ne.s32.totalorder %s59, %s62
      %p68 = scmp.eq.s32.totalorder %s23, 0
      %p69 = por %p67, %p68
      %p70 = scmp.ne.s32.totalorder %s59, %s62
      %p71 = scmp.eq.s32.totalorder %s28, 1
      %p72 = por %p70, %p71
      %p73 = scmp.ne.s32.totalorder %s62, %s63
      %p74 = scmp.eq.s32.totalorder %s28, 0
      %p75 = por %p73, %p74
      %p76 = scmp.ne.s32.totalorder %s62, %s63
      %p77 = scmp.eq.s32.totalorder %s29, 1
      %p78 = por %p76, %p77
      %p80 = scmp.ne.s32.totalorder %s63, %s79
      %p81 = scmp.eq.s32.totalorder %s29, 0
      %p82 = por %p80, %p81
      %s84 = sadd.s32 %s83, 1
      %p87 = scmp.eq.s32.totalorder %s23, 1
      %p88 = scmp.ne.s32.totalorder %s83, %s85
      %p89 = scmp.eq.s32.totalorder %s23, 0
      %p90 = por %p88, %p89
      %p91 = scmp.ne.s32.totalorder %s83, %s85
      %p92 = scmp.eq.s32.totalorder %s28, 1
      %p93 = por %p91, %p92
      %p94 = scmp.ne.s32.totalorder %s85, %s86
      %p95 = scmp.eq.s32.totalorder %s28, 0
      %p96 = por %p94, %p95
      %p97 = scmp.ne.s32.totalorder %s85, %s86
      %p98 = scmp.eq.s32.totalorder %s29, 1
      %p99 = por %p97, %p98
      %p101 = scmp.ne.s32.totalorder %s86, %s100
      %p102 = scmp.eq.s32.totalorder %s29, 0
      %p103 = por %p101, %p102
      %s105 = sadd.s32 %s104, 1
      %p108 = scmp.eq.s32.totalorder %s23, 1
      %p109 = scmp.ne.s32.totalorder %s104, %s106
      %p110 = scmp.eq.s32.totalorder %s23, 0
      %p111 = por %p109, %p110
      %p112 = scmp.ne.s32.totalorder %s104, %s106
      %p113 = scmp.eq.s32.totalorder %s28, 1
      %p114 = por %p112, %p113
      %p115 = scmp.ne.s32.totalorder %s106, %s107
      %p116 = scmp.eq.s32.totalorder %s28, 0
      %p117 = por %p115, %p116
      %p118 = scmp.ne.s32.totalorder %s106, %s107
      %p119 = scmp.eq.s32.totalorder %s29, 1
      %p120 = por %p118, %p119
      %p122 = scmp.ne.s32.totalorder %s107, %s121
      %p123 = scmp.eq.s32.totalorder %s29, 0
      %p124 = por %p122, %p123
      %s126 = sadd.s32 %s125, 1
      %p129 = scmp.eq.s32.totalorder %s23, 1
      %p130 = scmp.ne.s32.totalorder %s125, %s127
      %p131 = scmp.eq.s32.totalorder %s23, 0
      %p132 = por %p130, %p131
      %p133 = scmp.ne.s32.totalorder %s125, %s127
      %p134 = scmp.eq.s32.totalorder %s28, 1
      %p135 = por %p133, %p134
      %p136 = scmp.ne.s32.totalorder %s127, %s128
      %p137 = scmp.eq.s32.totalorder %s28, 0
      %p138 = por %p136, %p137
      %p139 = scmp.ne.s32.totalorder %s127, %s128
      %p140 = scmp.eq.s32.totalorder %s29, 1
      %p141 = por %p139, %p140
      %p143 = scmp.ne.s32.totalorder %s128, %s142
      %p144 = scmp.eq.s32.totalorder %s29, 0
      %p145 = por %p143, %p144
      %s147 = sadd.s32 %s146, 1
      %p150 = scmp.eq.s32.totalorder %s23, 1
      %p151 = scmp.ne.s32.totalorder %s146, %s148
      %p152 = scmp.eq.s32.totalorder %s23, 0
      %p153 = por %p151, %p152
      %p154 = scmp.ne.s32.totalorder %s146, %s148
      %p155 = scmp.eq.s32.totalorder %s28, 1
      %p156 = por %p154, %p155
      %p157 = scmp.ne.s32.totalorder %s148, %s149
      %p158 = scmp.eq.s32.totalorder %s28, 0
      %p159 = por %p157, %p158
      %p160 = scmp.ne.s32.totalorder %s148, %s149
      %p161 = scmp.eq.s32.totalorder %s29, 1
      %p162 = por %p160, %p161
      %p164 = scmp.ne.s32.totalorder %s149, %s163
      %p165 = scmp.eq.s32.totalorder %s29, 0
      %p166 = por %p164, %p165
      %s168 = sadd.s32 %s167, 1
      %p171 = scmp.eq.s32.totalorder %s23, 1
      %p172 = scmp.ne.s32.totalorder %s167, %s169
      %p173 = scmp.eq.s32.totalorder %s23, 0
      %p174 = por %p172, %p173
      %p175 = scmp.ne.s32.totalorder %s167, %s169
      %p176 = scmp.eq.s32.totalorder %s28, 1
      %p177 = por %p175, %p176
      %p178 = scmp.ne.s32.totalorder %s169, %s170
      %p179 = scmp.eq.s32.totalorder %s28, 0
      %p180 = por %p178, %p179
      %p181 = scmp.ne.s32.totalorder %s169, %s170
      %p182 = scmp.eq.s32.totalorder %s29, 1
      %p183 = por %p181, %p182
      %p185 = scmp.ne.s32.totalorder %s170, %s184
      %p186 = scmp.eq.s32.totalorder %s29, 0
      %p187 = por %p185, %p186
      %s188 = ssub.s32 %s23, %s30
      %p189 = scmp.eq.s32.totalorder %s188, 0
      %s191 = sadd.s32 %s190, 1
      %s192 = scalar_select %p189, %s190, %s191
      %p195 = pneg %p189
      %p196 = scmp.eq.s32.totalorder %s23, 1
      %p197 = por %p195, %p196
      %p198 = scmp.ne.s32.totalorder %s190, %s193
      %p199 = scmp.eq.s32.totalorder %s23, 0
      %p200 = por %p198, %p199
      %p201 = scmp.ne.s32.totalorder %s190, %s193
      %p202 = scmp.eq.s32.totalorder %s28, 1
      %p203 = por %p201, %p202
      %p204 = scmp.ne.s32.totalorder %s193, %s194
      %p205 = scmp.eq.s32.totalorder %s28, 0
      %p206 = por %p204, %p205
      %p207 = scmp.ne.s32.totalorder %s193, %s194
      %p208 = scmp.eq.s32.totalorder %s29, 1
      %p209 = por %p207, %p208
      %p211 = scmp.ne.s32.totalorder %s194, %s210
      %p212 = scmp.eq.s32.totalorder %s29, 0
      %p213 = por %p211, %p212
      %s214 = ssub.s32 %s23, %s30
      %p215 = scmp.eq.s32.totalorder %s214, 0
      %s217 = sadd.s32 %s216, 1
      %s218 = scalar_select %p215, %s216, %s217
      %p221 = pneg %p215
      %p222 = scmp.eq.s32.totalorder %s23, 1
      %p223 = por %p221, %p222
      %p224 = scmp.ne.s32.totalorder %s216, %s219
      %p225 = scmp.eq.s32.totalorder %s23, 0
      %p226 = por %p224, %p225
      %p227 = scmp.ne.s32.totalorder %s216, %s219
      %p228 = scmp.eq.s32.totalorder %s28, 1
      %p229 = por %p227, %p228
      %p230 = scmp.ne.s32.totalorder %s219, %s220
      %p231 = scmp.eq.s32.totalorder %s28, 0
      %p232 = por %p230, %p231
      %p233 = scmp.ne.s32.totalorder %s219, %s220
      %p234 = scmp.eq.s32.totalorder %s29, 1
      %p235 = por %p233, %p234
      %p237 = scmp.ne.s32.totalorder %s220, %s236
      %p238 = scmp.eq.s32.totalorder %s29, 0
      %p239 = por %p237, %p238
      %s240 = ssub.s32 %s23, %s30
      %p241 = scmp.eq.s32.totalorder %s240, 0
      %s243 = sadd.s32 %s242, 1
      %s244 = scalar_select %p241, %s242, %s243
      %p247 = pneg %p241
      %p248 = scmp.eq.s32.totalorder %s23, 1
      %p249 = por %p247, %p248
      %p250 = scmp.ne.s32.totalorder %s242, %s245
      %p251 = scmp.eq.s32.totalorder %s23, 0
      %p252 = por %p250, %p251
      %p253 = scmp.ne.s32.totalorder %s242, %s245
      %p254 = scmp.eq.s32.totalorder %s28, 1
      %p255 = por %p253, %p254
      %p256 = scmp.ne.s32.totalorder %s245, %s246
      %p257 = scmp.eq.s32.totalorder %s28, 0
      %p258 = por %p256, %p257
      %p259 = scmp.ne.s32.totalorder %s245, %s246
      %p260 = scmp.eq.s32.totalorder %s29, 1
      %p261 = por %p259, %p260
      %p263 = scmp.ne.s32.totalorder %s246, %s262
      %p264 = scmp.eq.s32.totalorder %s29, 0
      %p265 = por %p263, %p264
      %s266 = ssub.s32 %s23, %s30
      %p267 = scmp.eq.s32.totalorder %s266, 0
      %s269 = sadd.s32 %s268, 1
      %s270 = scalar_select %p267, %s268, %s269
      %p273 = pneg %p267
      %p274 = scmp.eq.s32.totalorder %s23, 1
      %p275 = por %p273, %p274
      %p276 = scmp.ne.s32.totalorder %s268, %s271
      %p277 = scmp.eq.s32.totalorder %s23, 0
      %p278 = por %p276, %p277
      %p279 = scmp.ne.s32.totalorder %s268, %s271
      %p280 = scmp.eq.s32.totalorder %s28, 1
      %p281 = por %p279, %p280
      %p282 = scmp.ne.s32.totalorder %s271, %s272
      %p283 = scmp.eq.s32.totalorder %s28, 0
      %p284 = por %p282, %p283
      %p285 = scmp.ne.s32.totalorder %s271, %s272
      %p286 = scmp.eq.s32.totalorder %s29, 1
      %p287 = por %p285, %p286
      %p289 = scmp.ne.s32.totalorder %s272, %s288
      %p290 = scmp.eq.s32.totalorder %s29, 0
      %p291 = por %p289, %p290
      %p292 = scmp.le.s32.totalorder 1, %s23
      %p293 = scmp.lt.s32.totalorder %s23, 3
      %p294 = pnand %p292, %p293
      %p295 = pneg %p294
      // Predicated region
      $region9: #{trajectory_vae_forward.1} parent=5 // pred_check
        _
      $region10: #{trajectory_vae_forward.1} parent=5 // pred_check_branch
        %297 = sbr.rel (%p294) target = $region12
      $region11: #{trajectory_vae_forward.1} parent=5 // pred_region
        %s298 = ssub.s32 %s23, 1
        // Predicated region
        $region13: #{trajectory_vae_forward.1} parent=11 // pred_check
          %p299 = pneg %p96
        $region14: #{trajectory_vae_forward.1} parent=11 // pred_check_branch
          %301 = sbr.rel (%p299) target = $region16
        $region15: #{trajectory_vae_forward.1} parent=11 // pred_region
          _
        $region16: #{trajectory_vae_forward.1} parent=11 // pred_fallthru
          _
        // Predicated region
        $region17: #{trajectory_vae_forward.1} parent=11 // pred_check
          %p302 = pneg %p117
        $region18: #{trajectory_vae_forward.1} parent=11 // pred_check_branch
          %304 = sbr.rel (%p302) target = $region20
        $region19: #{trajectory_vae_forward.1} parent=11 // pred_region
          _
        $region20: #{trajectory_vae_forward.1} parent=11 // pred_fallthru
          _
        // Predicated region
        $region21: #{trajectory_vae_forward.1} parent=11 // pred_check
          %p305 = pneg %p138
        $region22: #{trajectory_vae_forward.1} parent=11 // pred_check_branch
          %307 = sbr.rel (%p305) target = $region24
        $region23: #{trajectory_vae_forward.1} parent=11 // pred_region
          _
        $region24: #{trajectory_vae_forward.1} parent=11 // pred_fallthru
          _
        // Predicated region
        $region25: #{trajectory_vae_forward.1} parent=11 // pred_check
          %p308 = pneg %p159
        $region26: #{trajectory_vae_forward.1} parent=11 // pred_check_branch
          %310 = sbr.rel (%p308) target = $region28
        $region27: #{trajectory_vae_forward.1} parent=11 // pred_region
          _
        $region28: #{trajectory_vae_forward.1} parent=11 // pred_fallthru
          _
        // Predicated region
        $region29: #{trajectory_vae_forward.1} parent=11 // pred_check
          %p311 = pneg %p180
        $region30: #{trajectory_vae_forward.1} parent=11 // pred_check_branch
          %313 = sbr.rel (%p311) target = $region32
        $region31: #{trajectory_vae_forward.1} parent=11 // pred_region
          _
        $region32: #{trajectory_vae_forward.1} parent=11 // pred_fallthru
          _
      $region12: #{trajectory_vae_forward.1} parent=5 // pred_fallthru
        _
      %p314 = scmp.lt.s32.totalorder %s23, 2
      // Predicated region
      $region33: #{trajectory_vae_forward.1} parent=5 // pred_check
        %p315 = pneg %p314
      $region34: #{trajectory_vae_forward.1} parent=5 // pred_check_branch
        %317 = sbr.rel (%p315) target = $region36
      $region35: #{trajectory_vae_forward.1} parent=5 // pred_region
        // Predicated region
        $region37: #{trajectory_vae_forward.1} parent=35 // pred_check
          %p318 = pneg %p43
        $region38: #{trajectory_vae_forward.1} parent=35 // pred_check_branch
          %320 = sbr.rel (%p318) target = $region40
        $region39: #{trajectory_vae_forward.1} parent=35 // pred_region
          %p321 = scmp.lt.s32.totalorder %s23, 1
          %s322 = scalar_select %p321, %s23, 1
          %s323 = smul.addr %s322, 8
          %s324 = smul.addr %s323, 8
          %s325 = scalar_lea.vmem %s0, %s324
        $region40: #{trajectory_vae_forward.1} parent=35 // pred_fallthru
          _
        // Predicated region
        $region41: #{trajectory_vae_forward.1} parent=35 // pred_check
          %p326 = pneg %p69
        $region42: #{trajectory_vae_forward.1} parent=35 // pred_check_branch
          %328 = sbr.rel (%p326) target = $region44
        $region43: #{trajectory_vae_forward.1} parent=35 // pred_region
          %p329 = scmp.lt.s32.totalorder %s23, 1
          %s330 = scalar_select %p329, %s23, 1
          %s331 = smul.addr %s330, 8
          %s332 = scalar_lea.vmem %s1, %s331
        $region44: #{trajectory_vae_forward.1} parent=35 // pred_fallthru
          _
      $region36: #{trajectory_vae_forward.1} parent=5 // pred_fallthru
        _
      %p333 = scmp.le.s32.totalorder 1, %s23
      %p334 = scmp.lt.s32.totalorder %s23, 3
      %p335 = pnand %p333, %p334
      %p336 = pneg %p335
      // Predicated region
      $region45: #{trajectory_vae_forward.1} parent=5 // pred_check
        _
      $region46: #{trajectory_vae_forward.1} parent=5 // pred_check_branch
        %338 = sbr.rel (%p335) target = $region48
      $region47: #{trajectory_vae_forward.1} parent=5 // pred_region
        %s339 = ssub.s32 %s23, 1
        %p340 = scmp.lt.s32.totalorder %s28, 1
        %s341 = scalar_select %p340, %s28, 1
        %s342 = smul.addr %s341, 8
        %s343 = smul.addr %s342, 8
        %s344 = scalar_lea.vmem %s0, %s343
        %p345 = pneg %p49
        %p346 = pneg %p46
        %p347 = scmp.lt.s32.totalorder %s28, 1
        %s348 = scalar_select %p347, %s28, 1
        %s349 = smul.addr %s348, 8
        %s350 = scalar_lea.vmem %s1, %s349
        %p351 = pneg %p75
        %p352 = pneg %p72
        %p353 = pneg %p96
        %p354 = pneg %p93
        %p355 = pneg %p117
        %p356 = pneg %p114
        %p357 = pneg %p138
        %p358 = pneg %p135
        %p359 = pneg %p159
        %p360 = pneg %p156
        %p361 = pneg %p180
        %p362 = pneg %p177
        %p363 = pneg %p206
        %p364 = pneg %p203
        %s365 = sand.u32 %s193, 1
        %s366 = scalar_lea.sflag [#allocation3], %s365
        %s367 = sand.u32 %s193, 1
        %s368 = smul.addr %s367, 64
        %s369 = scalar_lea.vmem [#allocation2], %s368
        %p370 = pneg %p232
        %p371 = pneg %p229
        %s372 = sand.u32 %s219, 1
        %s373 = scalar_lea.sflag [#allocation5], %s372
        %s374 = sand.u32 %s219, 1
        %s375 = smul.addr %s374, 64
        %s376 = scalar_lea.vmem [#allocation4], %s375
        %p377 = pneg %p258
        %p378 = pneg %p255
        %p379 = scmp.lt.s32.totalorder %s28, 1
        %s380 = scalar_select %p379, %s28, 1
        %s381 = smul.addr %s380, 8
        %s382 = scalar_lea.vmem %s9, %s381
        %p383 = pneg %p284
        %p384 = pneg %p281
        %s385 = sand.u32 %s271, 1
        %s386 = sand.u32 %s271, 1
        %s387 = smul.addr %s386, 16
        %s388 = scalar_lea.vmem [#allocation6], %s387
        %p389 = scmp.lt.s32.totalorder %s28, 1
        %s390 = scalar_select %p389, %s28, 1
        %s391 = smul.addr %s390, 8
        %s392 = smul.addr %s391, 8
        %s393 = scalar_lea.vmem %s0, %s392
        %p394 = scmp.lt.s32.totalorder %s28, 1
        %s395 = scalar_select %p394, %s28, 1
        %s396 = smul.addr %s395, 8
        %s397 = scalar_lea.vmem %s1, %s396
        %p398 = scmp.lt.s32.totalorder %s28, 1
        %s399 = scalar_select %p398, %s28, 1
        %s400 = smul.addr %s399, 8
        %s401 = scalar_lea.vmem %s9, %s400
        %v403 = vld [vmem:[%s393] sm:$0xff]
        %v404 = vld [vmem:[%s393 + $0x8] sm:$0xff]
        %v405 = vld [vmem:[%s393 + $0x10] sm:$0xff]
        %v406 = vld [vmem:[%s393 + $0x18] sm:$0xff]
        %v407 = vld [vmem:[%s393 + $0x20] sm:$0xff]
        %v408 = vld [vmem:[%s393 + $0x28] sm:$0xff]
        %v409 = vld [vmem:[%s393 + $0x30] sm:$0xff]
        %v410 = vld [vmem:[%s393 + $0x38] sm:$0xff]
        %v411 = vld [vmem:[%s397] sm:$0xff]
        %v412 = vld [vmem:[%s5] sm:$0x1]
        %v413 = vld [vmem:[%s5 + $0x1] sm:$0x1]
        %v414 = vld [vmem:[%s5 + $0x2] sm:$0x1]
        %v415 = vld [vmem:[%s5 + $0x3] sm:$0x1]
        %v416 = vld [vmem:[%s5 + $0x4] sm:$0x1]
        %v417 = vld [vmem:[%s2] sm:$0xff]
        %v418 = vld [vmem:[%s2 + $0x8] sm:$0xff]
        %v419 = vld [vmem:[%s2 + $0x10] sm:$0xff]
        %v420 = vld [vmem:[%s2 + $0x18] sm:$0xff]
        %v421 = vld [vmem:[%s2 + $0x20] sm:$0xff]
        %v422 = vld [vmem:[%s2 + $0x28] sm:$0xff]
        %v423 = vld [vmem:[%s2 + $0x30] sm:$0xff]
        %v424 = vld [vmem:[%s2 + $0x38] sm:$0xff]
        %v425 = vld [vmem:[%s2 + $0x40] sm:$0xff]
        %v426 = vld [vmem:[%s2 + $0x48] sm:$0xff]
        %v427 = vld [vmem:[%s2 + $0x50] sm:$0xff]
        %v428 = vld [vmem:[%s2 + $0x58] sm:$0xff]
        %v429 = vld [vmem:[%s2 + $0x60] sm:$0xff]
        %v430 = vld [vmem:[%s2 + $0x68] sm:$0xff]
        %v431 = vld [vmem:[%s2 + $0x70] sm:$0xff]
        %v432 = vld [vmem:[%s2 + $0x78] sm:$0xff]
        %v433 = vld [vmem:[%s2 + $0x80] sm:$0xff]
        %v434 = vld [vmem:[%s2 + $0x88] sm:$0xff]
        %v435 = vld [vmem:[%s2 + $0x90] sm:$0xff]
        %v436 = vld [vmem:[%s2 + $0x98] sm:$0xff]
        %v437 = vld [vmem:[%s2 + $0xa0] sm:$0xff]
        %v438 = vld [vmem:[%s2 + $0xa8] sm:$0xff]
        %v439 = vld [vmem:[%s2 + $0xb0] sm:$0xff]
        %v440 = vld [vmem:[%s2 + $0xb8] sm:$0xff]
        %v441 = vld [vmem:[%s2 + $0xc0] sm:$0xff]
        %v442 = vld [vmem:[%s2 + $0xc8] sm:$0xff]
        %v443 = vld [vmem:[%s2 + $0xd0] sm:$0xff]
        %v444 = vld [vmem:[%s2 + $0xd8] sm:$0xff]
        %v445 = vld [vmem:[%s2 + $0xe0] sm:$0xff]
        %v446 = vld [vmem:[%s2 + $0xe8] sm:$0xff]
        %v447 = vld [vmem:[%s2 + $0xf0] sm:$0xff]
        %v448 = vld [vmem:[%s2 + $0xf8] sm:$0xff]
        %v449 = vld [vmem:[%s2 + $0x100] sm:$0xff]
        %v450 = vld [vmem:[%s2 + $0x108] sm:$0xff]
        %v451 = vld [vmem:[%s2 + $0x110] sm:$0xff]
        %v452 = vld [vmem:[%s2 + $0x118] sm:$0xff]
        %v453 = vld [vmem:[%s2 + $0x120] sm:$0xff]
        %v454 = vld [vmem:[%s2 + $0x128] sm:$0xff]
        %v455 = vld [vmem:[%s2 + $0x130] sm:$0xff]
        %v456 = vld [vmem:[%s2 + $0x138] sm:$0xff]
        %v457 = vld [vmem:[%s2 + $0x140] sm:$0xff]
        %v458 = vld [vmem:[%s2 + $0x148] sm:$0xff]
        %v459 = vld [vmem:[%s2 + $0x150] sm:$0xff]
        %v460 = vld [vmem:[%s2 + $0x158] sm:$0xff]
        %v461 = vld [vmem:[%s2 + $0x160] sm:$0xff]
        %v462 = vld [vmem:[%s2 + $0x168] sm:$0xff]
        %v463 = vld [vmem:[%s2 + $0x170] sm:$0xff]
        %v464 = vld [vmem:[%s2 + $0x178] sm:$0xff]
        %v465 = vld [vmem:[%s2 + $0x180] sm:$0xff]
        %v466 = vld [vmem:[%s2 + $0x188] sm:$0xff]
        %v467 = vld [vmem:[%s2 + $0x190] sm:$0xff]
        %v468 = vld [vmem:[%s2 + $0x198] sm:$0xff]
        %v469 = vld [vmem:[%s2 + $0x1a0] sm:$0xff]
        %v470 = vld [vmem:[%s2 + $0x1a8] sm:$0xff]
        %v471 = vld [vmem:[%s2 + $0x1b0] sm:$0xff]
        %v472 = vld [vmem:[%s2 + $0x1b8] sm:$0xff]
        %v473 = vld [vmem:[%s2 + $0x1c0] sm:$0xff]
        %v474 = vld [vmem:[%s2 + $0x1c8] sm:$0xff]
        %v475 = vld [vmem:[%s2 + $0x1d0] sm:$0xff]
        %v476 = vld [vmem:[%s2 + $0x1d8] sm:$0xff]
        %v477 = vld [vmem:[%s2 + $0x1e0] sm:$0xff]
        %v478 = vld [vmem:[%s2 + $0x1e8] sm:$0xff]
        %v479 = vld [vmem:[%s2 + $0x1f0] sm:$0xff]
        %v480 = vld [vmem:[%s2 + $0x1f8] sm:$0xff]
        %v481 = vld [vmem:[%s2 + $0x200] sm:$0xff]
        %v482 = vld [vmem:[%s2 + $0x208] sm:$0xff]
        %v483 = vld [vmem:[%s2 + $0x210] sm:$0xff]
        %v484 = vld [vmem:[%s2 + $0x218] sm:$0xff]
        %v485 = vld [vmem:[%s2 + $0x220] sm:$0xff]
        %v486 = vld [vmem:[%s2 + $0x228] sm:$0xff]
        %v487 = vld [vmem:[%s2 + $0x230] sm:$0xff]
        %v488 = vld [vmem:[%s2 + $0x238] sm:$0xff]
        %v489 = vld [vmem:[%s2 + $0x240] sm:$0xff]
        %v490 = vld [vmem:[%s2 + $0x248] sm:$0xff]
        %v491 = vld [vmem:[%s2 + $0x250] sm:$0xff]
        %v492 = vld [vmem:[%s2 + $0x258] sm:$0xff]
        %v493 = vld [vmem:[%s2 + $0x260] sm:$0xff]
        %v494 = vld [vmem:[%s2 + $0x268] sm:$0xff]
        %v495 = vld [vmem:[%s2 + $0x270] sm:$0xff]
        %v496 = vld [vmem:[%s2 + $0x278] sm:$0xff]
        %v497 = vld [vmem:[%s2 + $0x280] sm:$0xff]
        %v498 = vld [vmem:[%s2 + $0x288] sm:$0xff]
        %v499 = vld [vmem:[%s2 + $0x290] sm:$0xff]
        %v500 = vld [vmem:[%s2 + $0x298] sm:$0xff]
        %v501 = vld [vmem:[%s2 + $0x2a0] sm:$0xff]
        %v502 = vld [vmem:[%s2 + $0x2a8] sm:$0xff]
        %v503 = vld [vmem:[%s2 + $0x2b0] sm:$0xff]
        %v504 = vld [vmem:[%s2 + $0x2b8] sm:$0xff]
        %v505 = vld [vmem:[%s2 + $0x2c0] sm:$0xff]
        %v506 = vld [vmem:[%s2 + $0x2c8] sm:$0xff]
        %v507 = vld [vmem:[%s2 + $0x2d0] sm:$0xff]
        %v508 = vld [vmem:[%s2 + $0x2d8] sm:$0xff]
        %v509 = vld [vmem:[%s2 + $0x2e0] sm:$0xff]
        %v510 = vld [vmem:[%s2 + $0x2e8] sm:$0xff]
        %v511 = vld [vmem:[%s2 + $0x2f0] sm:$0xff]
        %v512 = vld [vmem:[%s2 + $0x2f8] sm:$0xff]
        %v513 = vld [vmem:[%s2 + $0x300] sm:$0xff]
        %v514 = vld [vmem:[%s2 + $0x308] sm:$0xff]
        %v515 = vld [vmem:[%s2 + $0x310] sm:$0xff]
        %v516 = vld [vmem:[%s2 + $0x318] sm:$0xff]
        %v517 = vld [vmem:[%s2 + $0x320] sm:$0xff]
        %v518 = vld [vmem:[%s2 + $0x328] sm:$0xff]
        %v519 = vld [vmem:[%s2 + $0x330] sm:$0xff]
        %v520 = vld [vmem:[%s2 + $0x338] sm:$0xff]
        %v521 = vld [vmem:[%s2 + $0x340] sm:$0xff]
        %v522 = vld [vmem:[%s2 + $0x348] sm:$0xff]
        %v523 = vld [vmem:[%s2 + $0x350] sm:$0xff]
        %v524 = vld [vmem:[%s2 + $0x358] sm:$0xff]
        %v525 = vld [vmem:[%s2 + $0x360] sm:$0xff]
        %v526 = vld [vmem:[%s2 + $0x368] sm:$0xff]
        %v527 = vld [vmem:[%s2 + $0x370] sm:$0xff]
        %v528 = vld [vmem:[%s2 + $0x378] sm:$0xff]
        %v529 = vld [vmem:[%s2 + $0x380] sm:$0xff]
        %v530 = vld [vmem:[%s2 + $0x388] sm:$0xff]
        %v531 = vld [vmem:[%s2 + $0x390] sm:$0xff]
        %v532 = vld [vmem:[%s2 + $0x398] sm:$0xff]
        %v533 = vld [vmem:[%s2 + $0x3a0] sm:$0xff]
        %v534 = vld [vmem:[%s2 + $0x3a8] sm:$0xff]
        %v535 = vld [vmem:[%s2 + $0x3b0] sm:$0xff]
        %v536 = vld [vmem:[%s2 + $0x3b8] sm:$0xff]
        %v537 = vld [vmem:[%s2 + $0x3c0] sm:$0xff]
        %v538 = vld [vmem:[%s2 + $0x3c8] sm:$0xff]
        %v539 = vld [vmem:[%s2 + $0x3d0] sm:$0xff]
        %v540 = vld [vmem:[%s2 + $0x3d8] sm:$0xff]
        %v541 = vld [vmem:[%s2 + $0x3e0] sm:$0xff]
        %v542 = vld [vmem:[%s2 + $0x3e8] sm:$0xff]
        %v543 = vld [vmem:[%s2 + $0x3f0] sm:$0xff]
        %v544 = vld [vmem:[%s2 + $0x3f8] sm:$0xff]
        %v545 = vperm.slane %v412, 0
        %546 = vmatpush.msra.mxu0 %v432
        %547 = vmatpush.msra.mxu0 %v431
        %548 = vmatpush.msra.mxu0 %v430
        %549 = vmatpush.msra.mxu0 %v429
        %550 = vmatpush.msra.mxu0 %v428
        %551 = vmatpush.msra.mxu0 %v427
        %552 = vmatpush.msra.mxu0 %v426
        %553 = vmatpush.msra.mxu0 %v425
        %554 = vmatpush.msra.mxu0 %v424
        %555 = vmatpush.msra.mxu0 %v423
        %556 = vmatpush.msra.mxu0 %v422
        %557 = vmatpush.msra.mxu0 %v421
        %558 = vmatpush.msra.mxu0 %v420
        %559 = vmatpush.msra.mxu0 %v419
        %560 = vmatpush.msra.mxu0 %v418
        %561 = vmatpush.msra.mxu0 %v417
        %562 = vmatmul.f32.gmra.mxu0 %v403
        %v563 = vpop.f32.mrf.mxu0
        %v564 = vadd.f32 %v545, %v563
        %565 = vdwg.mxu0
        %566 = vmatpush.msra.mxu0 %v448
        %567 = vmatpush.msra.mxu0 %v447
        %568 = vmatpush.msra.mxu0 %v446
        %569 = vmatpush.msra.mxu0 %v445
        %570 = vmatpush.msra.mxu0 %v444
        %571 = vmatpush.msra.mxu0 %v443
        %572 = vmatpush.msra.mxu0 %v442
        %573 = vmatpush.msra.mxu0 %v441
        %574 = vmatpush.msra.mxu0 %v440
        %575 = vmatpush.msra.mxu0 %v439
        %576 = vmatpush.msra.mxu0 %v438
        %577 = vmatpush.msra.mxu0 %v437
        %578 = vmatpush.msra.mxu0 %v436
        %579 = vmatpush.msra.mxu0 %v435
        %580 = vmatpush.msra.mxu0 %v434
        %581 = vmatpush.msra.mxu0 %v433
        %582 = vmatmul.f32.gmra.mxu0 %v404
        %v583 = vpop.f32.mrf.mxu0
        %v584 = vadd.f32 %v564, %v583
        %585 = vdwg.mxu0
        %586 = vmatpush.msra.mxu0 %v464
        %587 = vmatpush.msra.mxu0 %v463
        %588 = vmatpush.msra.mxu0 %v462
        %589 = vmatpush.msra.mxu0 %v461
        %590 = vmatpush.msra.mxu0 %v460
        %591 = vmatpush.msra.mxu0 %v459
        %592 = vmatpush.msra.mxu0 %v458
        %593 = vmatpush.msra.mxu0 %v457
        %594 = vmatpush.msra.mxu0 %v456
        %595 = vmatpush.msra.mxu0 %v455
        %596 = vmatpush.msra.mxu0 %v454
        %597 = vmatpush.msra.mxu0 %v453
        %598 = vmatpush.msra.mxu0 %v452
        %599 = vmatpush.msra.mxu0 %v451
        %600 = vmatpush.msra.mxu0 %v450
        %601 = vmatpush.msra.mxu0 %v449
        %602 = vmatmul.f32.gmra.mxu0 %v405
        %v603 = vpop.f32.mrf.mxu0
        %v604 = vadd.f32 %v584, %v603
        %605 = vdwg.mxu0
        %606 = vmatpush.msra.mxu0 %v480
        %607 = vmatpush.msra.mxu0 %v479
        %608 = vmatpush.msra.mxu0 %v478
        %609 = vmatpush.msra.mxu0 %v477
        %610 = vmatpush.msra.mxu0 %v476
        %611 = vmatpush.msra.mxu0 %v475
        %612 = vmatpush.msra.mxu0 %v474
        %613 = vmatpush.msra.mxu0 %v473
        %614 = vmatpush.msra.mxu0 %v472
        %615 = vmatpush.msra.mxu0 %v471
        %616 = vmatpush.msra.mxu0 %v470
        %617 = vmatpush.msra.mxu0 %v469
        %618 = vmatpush.msra.mxu0 %v468
        %619 = vmatpush.msra.mxu0 %v467
        %620 = vmatpush.msra.mxu0 %v466
        %621 = vmatpush.msra.mxu0 %v465
        %622 = vmatmul.f32.gmra.mxu0 %v406
        %v623 = vpop.f32.mrf.mxu0
        %v624 = vadd.f32 %v604, %v623
        %625 = vdwg.mxu0
        %626 = vmatpush.msra.mxu0 %v496
        %627 = vmatpush.msra.mxu0 %v495
        %628 = vmatpush.msra.mxu0 %v494
        %629 = vmatpush.msra.mxu0 %v493
        %630 = vmatpush.msra.mxu0 %v492
        %631 = vmatpush.msra.mxu0 %v491
        %632 = vmatpush.msra.mxu0 %v490
        %633 = vmatpush.msra.mxu0 %v489
        %634 = vmatpush.msra.mxu0 %v488
        %635 = vmatpush.msra.mxu0 %v487
        %636 = vmatpush.msra.mxu0 %v486
        %637 = vmatpush.msra.mxu0 %v485
        %638 = vmatpush.msra.mxu0 %v484
        %639 = vmatpush.msra.mxu0 %v483
        %640 = vmatpush.msra.mxu0 %v482
        %641 = vmatpush.msra.mxu0 %v481
        %642 = vmatmul.f32.gmra.mxu0 %v407
        %v643 = vpop.f32.mrf.mxu0
        %v644 = vadd.f32 %v624, %v643
        %645 = vdwg.mxu0
        %646 = vmatpush.msra.mxu0 %v512
        %647 = vmatpush.msra.mxu0 %v511
        %648 = vmatpush.msra.mxu0 %v510
        %649 = vmatpush.msra.mxu0 %v509
        %650 = vmatpush.msra.mxu0 %v508
        %651 = vmatpush.msra.mxu0 %v507
        %652 = vmatpush.msra.mxu0 %v506
        %653 = vmatpush.msra.mxu0 %v505
        %654 = vmatpush.msra.mxu0 %v504
        %655 = vmatpush.msra.mxu0 %v503
        %656 = vmatpush.msra.mxu0 %v502
        %657 = vmatpush.msra.mxu0 %v501
        %658 = vmatpush.msra.mxu0 %v500
        %659 = vmatpush.msra.mxu0 %v499
        %660 = vmatpush.msra.mxu0 %v498
        %661 = vmatpush.msra.mxu0 %v497
        %662 = vmatmul.f32.gmra.mxu0 %v408
        %v663 = vpop.f32.mrf.mxu0
        %v664 = vadd.f32 %v644, %v663
        %665 = vdwg.mxu0
        %666 = vmatpush.msra.mxu0 %v528
        %667 = vmatpush.msra.mxu0 %v527
        %668 = vmatpush.msra.mxu0 %v526
        %669 = vmatpush.msra.mxu0 %v525
        %670 = vmatpush.msra.mxu0 %v524
        %671 = vmatpush.msra.mxu0 %v523
        %672 = vmatpush.msra.mxu0 %v522
        %673 = vmatpush.msra.mxu0 %v521
        %674 = vmatpush.msra.mxu0 %v520
        %675 = vmatpush.msra.mxu0 %v519
        %676 = vmatpush.msra.mxu0 %v518
        %677 = vmatpush.msra.mxu0 %v517
        %678 = vmatpush.msra.mxu0 %v516
        %679 = vmatpush.msra.mxu0 %v515
        %680 = vmatpush.msra.mxu0 %v514
        %681 = vmatpush.msra.mxu0 %v513
        %682 = vmatmul.f32.gmra.mxu0 %v409
        %v683 = vpop.f32.mrf.mxu0
        %v684 = vadd.f32 %v664, %v683
        %685 = vdwg.mxu0
        %686 = vmatpush.msra.mxu0 %v544
        %687 = vmatpush.msra.mxu0 %v543
        %688 = vmatpush.msra.mxu0 %v542
        %689 = vmatpush.msra.mxu0 %v541
        %690 = vmatpush.msra.mxu0 %v540
        %691 = vmatpush.msra.mxu0 %v539
        %692 = vmatpush.msra.mxu0 %v538
        %693 = vmatpush.msra.mxu0 %v537
        %694 = vmatpush.msra.mxu0 %v536
        %695 = vmatpush.msra.mxu0 %v535
        %696 = vmatpush.msra.mxu0 %v534
        %697 = vmatpush.msra.mxu0 %v533
        %698 = vmatpush.msra.mxu0 %v532
        %699 = vmatpush.msra.mxu0 %v531
        %700 = vmatpush.msra.mxu0 %v530
        %701 = vmatpush.msra.mxu0 %v529
        %702 = vmatmul.f32.gmra.mxu0 %v410
        %v703 = vpop.f32.mrf.mxu0
        %v704 = vadd.f32 %v684, %v703
        %705 = vdwg.mxu0
        %v706 = vmax.f32 %v704, 0.0
        %v707 = vld [vmem:[%s4] sm:$0xff]
        %v708 = vld [vmem:[%s4 + $0x8] sm:$0xff]
        %v709 = vld [vmem:[%s4 + $0x10] sm:$0xff]
        %v710 = vld [vmem:[%s4 + $0x18] sm:$0xff]
        %vm711 = vcmask 261120
        %v713 = vsel %vm711, %v706, 0
        %715 = vmatpush.msra.mxu0 0.0
        %716 = vmatpush.msra.mxu0 0.0
        %717 = vmatpush.msra.mxu0 0.0
        %718 = vmatpush.msra.mxu0 0.0
        %719 = vmatpush.msra.mxu0 0.0
        %720 = vmatpush.msra.mxu0 0.0
        %721 = vmatpush.msra.mxu0 0.0
        %722 = vmatpush.msra.mxu0 0.0
        %723 = vmatpush.msra.mxu0 0.0
        %724 = vmatpush.msra.mxu0 0.0
        %725 = vmatpush.msra.mxu0 0.0
        %726 = vmatpush.msra.mxu0 0.0
        %727 = vmatpush.msra.mxu0 %v710
        %728 = vmatpush.msra.mxu0 %v709
        %729 = vmatpush.msra.mxu0 %v708
        %730 = vmatpush.msra.mxu0 %v707
        %731 = vmatmul.f32.gmra.mxu0 %v713
        %v732 = vpop.f32.mrf.mxu0
        %v733 = vadd.f32 0.0, %v732
        %734 = vdwg.mxu0
        %v735 = vperm.slane %v413, 0
        %v736 = vadd.f32 %v733, %v735
        %v737 = vmul.f32 %v736, 0.5
        %v738 = vmul.f32 %v737, 1.442695
        %v739 = vpow.pop %v738
        %741 = vrot.lane.b32.xlu0 %v411, 8
        %v742 = vpop.permute.xlu0 %741
        %v744 = vmul.f32 %v739, %v742
        %746 = vrot.lane.b32.xlu0 %v744, 120
        %v747 = vpop.permute.xlu0 %746
        %v749 = vadd.f32 %v736, %v747
        %vm750 = vcmask 64512
        %v751 = vsel %vm750, %v749, 0.0
        %s752 = scalar_lea.vmem %s4, 64
        %v753 = vld [vmem:[%s752] sm:$0xff]
        %v754 = vld [vmem:[%s752 + $0x8] sm:$0xff]
        %v755 = vld [vmem:[%s752 + $0x10] sm:$0xff]
        %v756 = vld [vmem:[%s752 + $0x18] sm:$0xff]
        %v757 = vperm.slane %v415, 0
        %v759 = vsel %vm711, %v751, 0
        %761 = vmatpush.msra.mxu0 0.0
        %762 = vmatpush.msra.mxu0 0.0
        %763 = vmatpush.msra.mxu0 0.0
        %764 = vmatpush.msra.mxu0 0.0
        %765 = vmatpush.msra.mxu0 0.0
        %766 = vmatpush.msra.mxu0 0.0
        %767 = vmatpush.msra.mxu0 0.0
        %768 = vmatpush.msra.mxu0 0.0
        %769 = vmatpush.msra.mxu0 0.0
        %770 = vmatpush.msra.mxu0 0.0
        %771 = vmatpush.msra.mxu0 0.0
        %772 = vmatpush.msra.mxu0 0.0
        %773 = vmatpush.msra.mxu0 %v756
        %774 = vmatpush.msra.mxu0 %v755
        %775 = vmatpush.msra.mxu0 %v754
        %776 = vmatpush.msra.mxu0 %v753
        %777 = vmatmul.f32.gmra.mxu0 %v759
        %v778 = vpop.f32.mrf.mxu0
        %v779 = vadd.f32 %v757, %v778
        %780 = vdwg.mxu0
        %v781 = vtanh.pop %v779
        %s782 = scalar_lea.vmem %s4, 96
        %v783 = vld [vmem:[%s782] sm:$0xff]
        %v784 = vld [vmem:[%s782 + $0x8] sm:$0xff]
        %v785 = vld [vmem:[%s782 + $0x10] sm:$0xff]
        %v786 = vld [vmem:[%s782 + $0x18] sm:$0xff]
        %v787 = vperm.slane %v416, 0
        %v789 = vsel %vm711, %v781, 0
        %791 = vmatpush.msra.mxu0 0.0
        %792 = vmatpush.msra.mxu0 0.0
        %793 = vmatpush.msra.mxu0 0.0
        %794 = vmatpush.msra.mxu0 0.0
        %795 = vmatpush.msra.mxu0 0.0
        %796 = vmatpush.msra.mxu0 0.0
        %797 = vmatpush.msra.mxu0 0.0
        %798 = vmatpush.msra.mxu0 0.0
        %799 = vmatpush.msra.mxu0 0.0
        %800 = vmatpush.msra.mxu0 0.0
        %801 = vmatpush.msra.mxu0 0.0
        %802 = vmatpush.msra.mxu0 0.0
        %803 = vmatpush.msra.mxu0 %v786
        %804 = vmatpush.msra.mxu0 %v785
        %805 = vmatpush.msra.mxu0 %v784
        %806 = vmatpush.msra.mxu0 %v783
        %807 = vmatmul.f32.gmra.mxu0 %v789
        %v808 = vpop.f32.mrf.mxu0
        %v809 = vadd.f32 %v787, %v808
        %810 = vdwg.mxu0
        %v811 = vadd.f32 %v751, %v809
        %s812 = scalar_lea.vmem %s4, 32
        %v813 = vld [vmem:[%s812] sm:$0xff]
        %v814 = vld [vmem:[%s812 + $0x8] sm:$0xff]
        %v815 = vld [vmem:[%s812 + $0x10] sm:$0xff]
        %v816 = vld [vmem:[%s812 + $0x18] sm:$0xff]
        %v817 = vperm.slane %v414, 0
        %v819 = vsel %vm711, %v811, 0
        %821 = vmatpush.msra.mxu0 0.0
        %822 = vmatpush.msra.mxu0 0.0
        %823 = vmatpush.msra.mxu0 0.0
        %824 = vmatpush.msra.mxu0 0.0
        %825 = vmatpush.msra.mxu0 0.0
        %826 = vmatpush.msra.mxu0 0.0
        %827 = vmatpush.msra.mxu0 0.0
        %828 = vmatpush.msra.mxu0 0.0
        %829 = vmatpush.msra.mxu0 0.0
        %830 = vmatpush.msra.mxu0 0.0
        %831 = vmatpush.msra.mxu0 0.0
        %832 = vmatpush.msra.mxu0 0.0
        %833 = vmatpush.msra.mxu0 %v816
        %834 = vmatpush.msra.mxu0 %v815
        %835 = vmatpush.msra.mxu0 %v814
        %836 = vmatpush.msra.mxu0 %v813
        %837 = vmatmul.f32.gmra.mxu0 %v759
        %v838 = vpop.f32.mrf.mxu0
        %v839 = vadd.f32 %v817, %v838
        %840 = vmatmul.f32.gmra.mxu0 %v819
        %v841 = vpop.f32.mrf.mxu0
        %v842 = vadd.f32 %v817, %v841
        %843 = vdwg.mxu0
        %v844 = vmax.f32 %v839, 0.0
        %v845 = vmax.f32 %v842, 0.0
        %v846 = vpack.c.bf16 %v845, %v844
        %v847 = vld [vmem:[%s3] sm:$0xff]
        %v848 = vld [vmem:[%s3 + $0x8] sm:$0xff]
        %v849 = vld [vmem:[%s3 + $0x10] sm:$0xff]
        %v850 = vld [vmem:[%s3 + $0x18] sm:$0xff]
        %v851 = vld [vmem:[%s3 + $0x20] sm:$0xff]
        %v852 = vld [vmem:[%s3 + $0x28] sm:$0xff]
        %v853 = vld [vmem:[%s3 + $0x30] sm:$0xff]
        %v854 = vld [vmem:[%s3 + $0x38] sm:$0xff]
        %v855 = vld [vmem:[%s3 + $0x40] sm:$0xff]
        %v856 = vld [vmem:[%s3 + $0x48] sm:$0xff]
        %v857 = vld [vmem:[%s3 + $0x50] sm:$0xff]
        %v858 = vld [vmem:[%s3 + $0x58] sm:$0xff]
        %v859 = vld [vmem:[%s3 + $0x60] sm:$0xff]
        %v860 = vld [vmem:[%s3 + $0x68] sm:$0xff]
        %v861 = vld [vmem:[%s3 + $0x70] sm:$0xff]
        %v862 = vld [vmem:[%s3 + $0x78] sm:$0xff]
        %v863 = vld [vmem:[%s6] sm:$0xff]
        %v865 = vperm.slane %v863, 0
        %v866 = vperm.slane %v863, 1
        %v867 = vperm.slane %v863, 2
        %v868 = vperm.slane %v863, 3
        %v869 = vperm.slane %v863, 4
        %v870 = vperm.slane %v863, 5
        %v871 = vperm.slane %v863, 6
        %v872 = vperm.slane %v863, 7
        %v897 = vunpack.c.l.b16 %v847
        %v898 = vunpack.c.h.b16 %v847
        %v899 = vunpack.c.l.b16 %v848
        %v900 = vunpack.c.h.b16 %v848
        %v901 = vunpack.c.l.b16 %v849
        %v902 = vunpack.c.h.b16 %v849
        %v903 = vunpack.c.l.b16 %v850
        %v904 = vunpack.c.h.b16 %v850
        %v905 = vunpack.c.l.b16 %v851
        %v906 = vunpack.c.h.b16 %v851
        %v907 = vunpack.c.l.b16 %v852
        %v908 = vunpack.c.h.b16 %v852
        %v909 = vunpack.c.l.b16 %v853
        %v910 = vunpack.c.h.b16 %v853
        %v911 = vunpack.c.l.b16 %v854
        %v912 = vunpack.c.h.b16 %v854
        %v913 = vunpack.c.l.b16 %v855
        %v914 = vunpack.c.h.b16 %v855
        %v915 = vunpack.c.l.b16 %v856
        %v916 = vunpack.c.h.b16 %v856
        %v917 = vunpack.c.l.b16 %v857
        %v918 = vunpack.c.h.b16 %v857
        %v919 = vunpack.c.l.b16 %v858
        %v920 = vunpack.c.h.b16 %v858
        %v921 = vunpack.c.l.b16 %v859
        %v922 = vunpack.c.h.b16 %v859
        %v923 = vunpack.c.l.b16 %v860
        %v924 = vunpack.c.h.b16 %v860
        %v925 = vunpack.c.l.b16 %v861
        %v926 = vunpack.c.h.b16 %v861
        %v927 = vunpack.c.l.b16 %v862
        %v928 = vunpack.c.h.b16 %v862
        %v929 = vpack.c.b16 %v905, %v897
        %v930 = vpack.c.b16 %v906, %v898
        %v931 = vpack.c.b16 %v907, %v899
        %v932 = vpack.c.b16 %v908, %v900
        %v933 = vpack.c.b16 %v909, %v901
        %v934 = vpack.c.b16 %v910, %v902
        %v935 = vpack.c.b16 %v911, %v903
        %v936 = vpack.c.b16 %v912, %v904
        %v937 = vpack.c.b16 %v921, %v913
        %v938 = vpack.c.b16 %v922, %v914
        %v939 = vpack.c.b16 %v923, %v915
        %v940 = vpack.c.b16 %v924, %v916
        %v941 = vpack.c.b16 %v925, %v917
        %v942 = vpack.c.b16 %v926, %v918
        %v943 = vpack.c.b16 %v927, %v919
        %v944 = vpack.c.b16 %v928, %v920
        %v962 = vsel %vm711, %v846, 0
        %964 = vmatpush.bf16.msra.mxu0 0
        %965 = vmatpush.bf16.msra.mxu0 0
        %966 = vmatpush.bf16.msra.mxu0 0
        %967 = vmatpush.bf16.msra.mxu0 0
        %968 = vmatpush.bf16.msra.mxu0 0
        %969 = vmatpush.bf16.msra.mxu0 0
        %970 = vmatpush.bf16.msra.mxu0 %v937
        %971 = vmatpush.bf16.msra.mxu0 %v929
        %972 = vmatmul.bf16.gmra.mxu0 %v962
        %v973 = vpop.f32.mrf.mxu0
        %v974 = vadd.f32 %v865, %v973
        %v975 = vpop.f32.mrf.mxu0
        %v976 = vadd.f32 %v865, %v975
        %977 = vdwg.mxu0
        %978 = vmatpush.bf16.msra.mxu0 0
        %979 = vmatpush.bf16.msra.mxu0 0
        %980 = vmatpush.bf16.msra.mxu0 0
        %981 = vmatpush.bf16.msra.mxu0 0
        %982 = vmatpush.bf16.msra.mxu0 0
        %983 = vmatpush.bf16.msra.mxu0 0
        %984 = vmatpush.bf16.msra.mxu0 %v938
        %985 = vmatpush.bf16.msra.mxu0 %v930
        %986 = vmatmul.bf16.gmra.mxu0 %v962
        %v987 = vpop.f32.mrf.mxu0
        %v988 = vadd.f32 %v866, %v987
        %v989 = vpop.f32.mrf.mxu0
        %v990 = vadd.f32 %v866, %v989
        %991 = vdwg.mxu0
        %992 = vmatpush.bf16.msra.mxu0 0
        %993 = vmatpush.bf16.msra.mxu0 0
        %994 = vmatpush.bf16.msra.mxu0 0
        %995 = vmatpush.bf16.msra.mxu0 0
        %996 = vmatpush.bf16.msra.mxu0 0
        %997 = vmatpush.bf16.msra.mxu0 0
        %998 = vmatpush.bf16.msra.mxu0 %v939
        %999 = vmatpush.bf16.msra.mxu0 %v931
        %1000 = vmatmul.bf16.gmra.mxu0 %v962
        %v1001 = vpop.f32.mrf.mxu0
        %v1002 = vadd.f32 %v867, %v1001
        %v1003 = vpop.f32.mrf.mxu0
        %v1004 = vadd.f32 %v867, %v1003
        %1005 = vdwg.mxu0
        %1006 = vmatpush.bf16.msra.mxu0 0
        %1007 = vmatpush.bf16.msra.mxu0 0
        %1008 = vmatpush.bf16.msra.mxu0 0
        %1009 = vmatpush.bf16.msra.mxu0 0
        %1010 = vmatpush.bf16.msra.mxu0 0
        %1011 = vmatpush.bf16.msra.mxu0 0
        %1012 = vmatpush.bf16.msra.mxu0 %v940
        %1013 = vmatpush.bf16.msra.mxu0 %v932
        %1014 = vmatmul.bf16.gmra.mxu0 %v962
        %v1015 = vpop.f32.mrf.mxu0
        %v1016 = vadd.f32 %v868, %v1015
        %v1017 = vpop.f32.mrf.mxu0
        %v1018 = vadd.f32 %v868, %v1017
        %1019 = vdwg.mxu0
        %1020 = vmatpush.bf16.msra.mxu0 0
        %1021 = vmatpush.bf16.msra.mxu0 0
        %1022 = vmatpush.bf16.msra.mxu0 0
        %1023 = vmatpush.bf16.msra.mxu0 0
        %1024 = vmatpush.bf16.msra.mxu0 0
        %1025 = vmatpush.bf16.msra.mxu0 0
        %1026 = vmatpush.bf16.msra.mxu0 %v941
        %1027 = vmatpush.bf16.msra.mxu0 %v933
        %1028 = vmatmul.bf16.gmra.mxu0 %v962
        %v1029 = vpop.f32.mrf.mxu0
        %v1030 = vadd.f32 %v869, %v1029
        %v1031 = vpop.f32.mrf.mxu0
        %v1032 = vadd.f32 %v869, %v1031
        %1033 = vdwg.mxu0
        %1034 = vmatpush.bf16.msra.mxu0 0
        %1035 = vmatpush.bf16.msra.mxu0 0
        %1036 = vmatpush.bf16.msra.mxu0 0
        %1037 = vmatpush.bf16.msra.mxu0 0
        %1038 = vmatpush.bf16.msra.mxu0 0
        %1039 = vmatpush.bf16.msra.mxu0 0
        %1040 = vmatpush.bf16.msra.mxu0 %v942
        %1041 = vmatpush.bf16.msra.mxu0 %v934
        %1042 = vmatmul.bf16.gmra.mxu0 %v962
        %v1043 = vpop.f32.mrf.mxu0
        %v1044 = vadd.f32 %v870, %v1043
        %v1045 = vpop.f32.mrf.mxu0
        %v1046 = vadd.f32 %v870, %v1045
        %1047 = vdwg.mxu0
        %1048 = vmatpush.bf16.msra.mxu0 0
        %1049 = vmatpush.bf16.msra.mxu0 0
        %1050 = vmatpush.bf16.msra.mxu0 0
        %1051 = vmatpush.bf16.msra.mxu0 0
        %1052 = vmatpush.bf16.msra.mxu0 0
        %1053 = vmatpush.bf16.msra.mxu0 0
        %1054 = vmatpush.bf16.msra.mxu0 %v943
        %1055 = vmatpush.bf16.msra.mxu0 %v935
        %1056 = vmatmul.bf16.gmra.mxu0 %v962
        %v1057 = vpop.f32.mrf.mxu0
        %v1058 = vadd.f32 %v871, %v1057
        %v1059 = vpop.f32.mrf.mxu0
        %v1060 = vadd.f32 %v871, %v1059
        %1061 = vdwg.mxu0
        %1062 = vmatpush.bf16.msra.mxu0 0
        %1063 = vmatpush.bf16.msra.mxu0 0
        %1064 = vmatpush.bf16.msra.mxu0 0
        %1065 = vmatpush.bf16.msra.mxu0 0
        %1066 = vmatpush.bf16.msra.mxu0 0
        %1067 = vmatpush.bf16.msra.mxu0 0
        %1068 = vmatpush.bf16.msra.mxu0 %v944
        %1069 = vmatpush.bf16.msra.mxu0 %v936
        %1070 = vmatmul.bf16.gmra.mxu0 %v962
        %v1071 = vpop.f32.mrf.mxu0
        %v1072 = vadd.f32 %v872, %v1071
        %v1073 = vpop.f32.mrf.mxu0
        %v1074 = vadd.f32 %v872, %v1073
        %1075 = vdwg.mxu0
        %v1076 = vmul.f32 %v974, 0.5
        %v1077 = vmul.f32 %v988, 0.5
        %v1078 = vmul.f32 %v1002, 0.5
        %v1079 = vmul.f32 %v1016, 0.5
        %v1080 = vmul.f32 %v1030, 0.5
        %v1081 = vmul.f32 %v1044, 0.5
        %v1082 = vmul.f32 %v1058, 0.5
        %v1083 = vmul.f32 %v1072, 0.5
        %v1084 = vmul.f32 %v976, 0.5
        %v1085 = vmul.f32 %v990, 0.5
        %v1086 = vmul.f32 %v1004, 0.5
        %v1087 = vmul.f32 %v1018, 0.5
        %v1088 = vmul.f32 %v1032, 0.5
        %v1089 = vmul.f32 %v1046, 0.5
        %v1090 = vmul.f32 %v1060, 0.5
        %v1091 = vmul.f32 %v1074, 0.5
        %v1092 = vtanh.pop %v1076
        %v1093 = vtanh.pop %v1077
        %v1094 = vtanh.pop %v1078
        %v1095 = vtanh.pop %v1079
        %v1096 = vtanh.pop %v1080
        %v1097 = vtanh.pop %v1081
        %v1098 = vtanh.pop %v1082
        %v1099 = vtanh.pop %v1083
        %v1100 = vtanh.pop %v1084
        %v1101 = vtanh.pop %v1085
        %v1102 = vtanh.pop %v1086
        %v1103 = vtanh.pop %v1087
        %v1104 = vtanh.pop %v1088
        %v1105 = vtanh.pop %v1089
        %v1106 = vtanh.pop %v1090
        %v1107 = vtanh.pop %v1091
        %v1108 = vmul.f32 %v1092, 0.5
        %v1109 = vmul.f32 %v1093, 0.5
        %v1110 = vmul.f32 %v1094, 0.5
        %v1111 = vmul.f32 %v1095, 0.5
        %v1112 = vmul.f32 %v1096, 0.5
        %v1113 = vmul.f32 %v1097, 0.5
        %v1114 = vmul.f32 %v1098, 0.5
        %v1115 = vmul.f32 %v1099, 0.5
        %v1116 = vmul.f32 %v1100, 0.5
        %v1117 = vmul.f32 %v1101, 0.5
        %v1118 = vmul.f32 %v1102, 0.5
        %v1119 = vmul.f32 %v1103, 0.5
        %v1120 = vmul.f32 %v1104, 0.5
        %v1121 = vmul.f32 %v1105, 0.5
        %v1122 = vmul.f32 %v1106, 0.5
        %v1123 = vmul.f32 %v1107, 0.5
        %v1124 = vadd.f32 %v1108, 0.5
        %v1125 = vadd.f32 %v1109, 0.5
        %v1126 = vadd.f32 %v1110, 0.5
        %v1127 = vadd.f32 %v1111, 0.5
        %v1128 = vadd.f32 %v1112, 0.5
        %v1129 = vadd.f32 %v1113, 0.5
        %v1130 = vadd.f32 %v1114, 0.5
        %v1131 = vadd.f32 %v1115, 0.5
        %v1132 = vadd.f32 %v1116, 0.5
        %v1133 = vadd.f32 %v1117, 0.5
        %v1134 = vadd.f32 %v1118, 0.5
        %v1135 = vadd.f32 %v1119, 0.5
        %v1136 = vadd.f32 %v1120, 0.5
        %v1137 = vadd.f32 %v1121, 0.5
        %v1138 = vadd.f32 %v1122, 0.5
        %v1139 = vadd.f32 %v1123, 0.5
        %1140 = vst [vmem:[%s369] sm:$0xff] %v1124
        %1141 = vst [vmem:[%s369 + $0x8] sm:$0xff] %v1125
        %1142 = vst [vmem:[%s369 + $0x10] sm:$0xff] %v1126
        %1143 = vst [vmem:[%s369 + $0x18] sm:$0xff] %v1127
        %1144 = vst [vmem:[%s369 + $0x20] sm:$0xff] %v1128
        %1145 = vst [vmem:[%s369 + $0x28] sm:$0xff] %v1129
        %1146 = vst [vmem:[%s369 + $0x30] sm:$0xff] %v1130
        %1147 = vst [vmem:[%s369 + $0x38] sm:$0xff] %v1131
        %1148 = vst [vmem:[%s376] sm:$0xff] %v1132
        %1149 = vst [vmem:[%s376 + $0x8] sm:$0xff] %v1133
        %1150 = vst [vmem:[%s376 + $0x10] sm:$0xff] %v1134
        %1151 = vst [vmem:[%s376 + $0x18] sm:$0xff] %v1135
        %1152 = vst [vmem:[%s376 + $0x20] sm:$0xff] %v1136
        %1153 = vst [vmem:[%s376 + $0x28] sm:$0xff] %v1137
        %1154 = vst [vmem:[%s376 + $0x30] sm:$0xff] %v1138
        %1155 = vst [vmem:[%s376 + $0x38] sm:$0xff] %v1139
        %vm1156 = vcmask 130048
        %1157 = vst.msk [vmem:[%s401] sm:$0xff] %vm1156, %v736
        %1158 = vst.msk [vmem:[%s388] sm:$0xff] %vm750, %v749
        %s1159 = scalar_lea.vmem %s388, 8 [#allocation6]
        %1160 = vst.msk [vmem:[%s1159] sm:$0xff] %vm750, %v811
        %s1161 = sand.u32 %s193, 1
        %s1162 = scalar_lea.sflag [#allocation3], %s1161
        %s1163 = sand.u32 %s193, 1
        %s1164 = smul.addr %s1163, 64
        %s1165 = scalar_lea.vmem [#allocation2], %s1164
        %s1166 = sand.u32 %s219, 1
        %s1167 = scalar_lea.sflag [#allocation5], %s1166
        %s1168 = sand.u32 %s219, 1
        %s1169 = smul.addr %s1168, 64
        %s1170 = scalar_lea.vmem [#allocation4], %s1169
        %p1171 = scmp.lt.s32.totalorder %s28, 1
        %s1172 = scalar_select %p1171, %s28, 1
        %s1173 = smul.addr %s1172, 8
        %s1174 = scalar_lea.vmem %s9, %s1173
        %s1175 = sand.u32 %s271, 1
        %s1176 = sand.u32 %s271, 1
        %s1177 = smul.addr %s1176, 16
        %s1178 = scalar_lea.vmem [#allocation6], %s1177
        // Predicated region
        $region49: #{trajectory_vae_forward.1} parent=47 // pred_check
          %p1179 = pneg %p203
        $region50: #{trajectory_vae_forward.1} parent=47 // pred_check_branch
          %1181 = sbr.rel (%p1179) target = $region52
        $region51: #{trajectory_vae_forward.1} parent=47 // pred_region
          %1183 = vsyncadd %s1162, 0
          %s1184 = smul.addr %s28, 8
          %s1185 = smul.addr %s1184, 8
          %s1186 = scalar_lea.hbm %s7, %s1185
          %s1188 = sshll.u32 %s1165, 4
          %s1189 = int_to_ptr.vmem [resolvable:$true] %s1188
          %s1190 = sshll.u32 %s1186, 4
          %s1191 = int_to_ptr.hbm [resolvable:$true] %s1190
          %1193 = dma.vmem_to_hbm [thread:$0]  %s1189, 1024, %s1191, %s1162
        $region52: #{trajectory_vae_forward.1} parent=47 // pred_fallthru
          _
        // Predicated region
        $region53: #{trajectory_vae_forward.1} parent=47 // pred_check
          %p1194 = pneg %p229
        $region54: #{trajectory_vae_forward.1} parent=47 // pred_check_branch
          %1196 = sbr.rel (%p1194) target = $region56
        $region55: #{trajectory_vae_forward.1} parent=47 // pred_region
          %1198 = vsyncadd %s1167, 0
          %s1199 = smul.addr %s28, 8
          %s1200 = smul.addr %s1199, 8
          %s1201 = scalar_lea.hbm %s8, %s1200
          %s1203 = sshll.u32 %s1170, 4
          %s1204 = int_to_ptr.vmem [resolvable:$true] %s1203
          %s1205 = sshll.u32 %s1201, 4
          %s1206 = int_to_ptr.hbm [resolvable:$true] %s1205
          %1208 = dma.vmem_to_hbm [thread:$0]  %s1204, 1024, %s1206, %s1167
        $region56: #{trajectory_vae_forward.1} parent=47 // pred_fallthru
          _
        // Predicated region
        $region57: #{trajectory_vae_forward.1} parent=47 // pred_check
          %p1209 = pneg %p255
        $region58: #{trajectory_vae_forward.1} parent=47 // pred_check_branch
          %1211 = sbr.rel (%p1209) target = $region60
        $region59: #{trajectory_vae_forward.1} parent=47 // pred_region
          _
        $region60: #{trajectory_vae_forward.1} parent=47 // pred_fallthru
          _
        // Predicated region
        $region61: #{trajectory_vae_forward.1} parent=47 // pred_check
          %p1212 = pneg %p281
        $region62: #{trajectory_vae_forward.1} parent=47 // pred_check_branch
          %1214 = sbr.rel (%p1212) target = $region64
        $region63: #{trajectory_vae_forward.1} parent=47 // pred_region
          %s1215 = smul.addr %s28, 8
          %s1216 = scalar_lea.vmem %s10, %s1215
          // Predicated region
          $region65: #{trajectory_vae_forward.1} parent=63 // pred_check
            _
          $region66: #{trajectory_vae_forward.1} parent=63 // pred_check_branch
            %1218 = sbr.rel (0) target = $region68
          $region67: #{trajectory_vae_forward.1} parent=63 // pred_region
            // Predicated region
            $region69: #{trajectory_vae_forward.1} parent=67 // pred_check
              _
            $region70: #{trajectory_vae_forward.1} parent=67 // pred_check_branch
              %1220 = sbr.rel (0) target = $region72
            $region71: #{trajectory_vae_forward.1} parent=67 // pred_region
              // Predicated region
              $region84: #{trajectory_vae_forward.1} parent=71 // pred_check
                _
              $region85: #{trajectory_vae_forward.1} parent=71 // pred_check_branch
                %1238 = sbr.rel (0) target = $region87
              $region86: #{trajectory_vae_forward.1} parent=71 // pred_region
                loop: start=0, step=1, limit=1
                $region88: #{trajectory_vae_forward.1} parent=86 // loop_pre_header
                  _
                $region89: #{trajectory_vae_forward.1} parent=86 // loop_header
                  %s1240 = sphi 0, %s1244
                  %p1241 = scmp.ge.s32.totalorder %s1240, 1
                  %s1245 = sphi %s1178, %s1178
                  %s1246 = sphi %s1216, %s1216
                $region90: #{trajectory_vae_forward.1} parent=86 // loop_header_branch
                  %1243 = sbr.rel (%p1241) target = $region94
                $region91: #{trajectory_vae_forward.1} parent=86 // loop_body
                  %v1247 = vld [vmem:[%s1245] sm:$0xff]
                  %1248 = vst [vmem:[%s1246] sm:$0xff] %v1247
                  %v1249 = vld [vmem:[%s1245 + $0x8] sm:$0xff]
                  %1250 = vst [vmem:[%s1246 + $0x10] sm:$0xff] %v1249
                $region92: #{trajectory_vae_forward.1} parent=86 // loop_footer
                  %s1244 = sadd.s32 1, %s1240
                $region93: #{trajectory_vae_forward.1} parent=86 // loop_footer_branch
                  %1239 = sbr.rel target = $region89
                $region94: #{trajectory_vae_forward.1} parent=86 // loop_exit
                  _
              $region87: #{trajectory_vae_forward.1} parent=71 // pred_fallthru
                _
              // Predicated region
              $region95: #{trajectory_vae_forward.1} parent=71 // pred_check
                _
              $region96: #{trajectory_vae_forward.1} parent=71 // pred_check_branch
                %1252 = sbr.rel target = $region98
              $region97: #{trajectory_vae_forward.1} parent=71 // pred_region
                _
              $region98: #{trajectory_vae_forward.1} parent=71 // pred_fallthru
                _
            $region72: #{trajectory_vae_forward.1} parent=67 // pred_fallthru
              _
            // Predicated region
            $region73: #{trajectory_vae_forward.1} parent=67 // pred_check
              _
            $region74: #{trajectory_vae_forward.1} parent=67 // pred_check_branch
              %1222 = sbr.rel target = $region76
            $region75: #{trajectory_vae_forward.1} parent=67 // pred_region
              %s1224 = ssub.s32 256, 1
              loop: start=0, step=1, limit=1
              $region77: #{trajectory_vae_forward.1} parent=75 // loop_pre_header
                _
              $region78: #{trajectory_vae_forward.1} parent=75 // loop_header
                %s1226 = sphi 0, %s1230
                %p1227 = scmp.ge.s32.totalorder %s1226, 1
                %s1231 = sphi %s1178, %s1178
                %s1232 = sphi %s1216, %s1216
              $region79: #{trajectory_vae_forward.1} parent=75 // loop_header_branch
                %1229 = sbr.rel (%p1227) target = $region83
              $region80: #{trajectory_vae_forward.1} parent=75 // loop_body
                %v1233 = vld [vmem:[%s1231] sm:%s1224]
                %1234 = vst [vmem:[%s1232] sm:%s1224] %v1233
                %v1235 = vld [vmem:[%s1231 + $0x8] sm:%s1224]
                %1236 = vst [vmem:[%s1232 + $0x10] sm:%s1224] %v1235
              $region81: #{trajectory_vae_forward.1} parent=75 // loop_footer
                %s1230 = sadd.s32 1, %s1226
              $region82: #{trajectory_vae_forward.1} parent=75 // loop_footer_branch
                %1225 = sbr.rel target = $region78
              $region83: #{trajectory_vae_forward.1} parent=75 // loop_exit
                _
            $region76: #{trajectory_vae_forward.1} parent=67 // pred_fallthru
              _
          $region68: #{trajectory_vae_forward.1} parent=63 // pred_fallthru
            _
          %1253 = vnop
        $region64: #{trajectory_vae_forward.1} parent=47 // pred_fallthru
          _
      $region48: #{trajectory_vae_forward.1} parent=5 // pred_fallthru
        _
      %p1254 = scmp.le.s32.totalorder 2, %s23
      // Predicated region
      $region99: #{trajectory_vae_forward.1} parent=5 // pred_check
        %p1255 = pneg %p1254
      $region100: #{trajectory_vae_forward.1} parent=5 // pred_check_branch
        %1257 = sbr.rel (%p1255) target = $region102
      $region101: #{trajectory_vae_forward.1} parent=5 // pred_region
        %s1258 = ssub.s32 %s23, 2
        // Predicated region
        $region103: #{trajectory_vae_forward.1} parent=101 // pred_check
          %p1259 = pneg %p209
        $region104: #{trajectory_vae_forward.1} parent=101 // pred_check_branch
          %1261 = sbr.rel (%p1259) target = $region106
        $region105: #{trajectory_vae_forward.1} parent=101 // pred_region
          %s1262 = sand.u32 %s194, 1
          %s1263 = scalar_lea.sflag [#allocation3], %s1262
          %s1264 = sand.u32 %s194, 1
          %s1265 = smul.addr %s1264, 64
          %s1266 = scalar_lea.vmem [#allocation2], %s1265
          %1268 = dma.done %s1263, 1024
        $region106: #{trajectory_vae_forward.1} parent=101 // pred_fallthru
          _
        // Predicated region
        $region107: #{trajectory_vae_forward.1} parent=101 // pred_check
          %p1269 = pneg %p235
        $region108: #{trajectory_vae_forward.1} parent=101 // pred_check_branch
          %1271 = sbr.rel (%p1269) target = $region110
        $region109: #{trajectory_vae_forward.1} parent=101 // pred_region
          %s1272 = sand.u32 %s220, 1
          %s1273 = scalar_lea.sflag [#allocation5], %s1272
          %s1274 = sand.u32 %s220, 1
          %s1275 = smul.addr %s1274, 64
          %s1276 = scalar_lea.vmem [#allocation4], %s1275
          %1278 = dma.done %s1273, 1024
        $region110: #{trajectory_vae_forward.1} parent=101 // pred_fallthru
          _
        // Predicated region
        $region111: #{trajectory_vae_forward.1} parent=101 // pred_check
          %p1279 = pneg %p261
        $region112: #{trajectory_vae_forward.1} parent=101 // pred_check_branch
          %1281 = sbr.rel (%p1279) target = $region114
        $region113: #{trajectory_vae_forward.1} parent=101 // pred_region
          %p1282 = scmp.lt.s32.totalorder %s29, 1
          %s1283 = scalar_select %p1282, %s29, 1
          %s1284 = smul.addr %s1283, 8
          %s1285 = scalar_lea.vmem %s9, %s1284
        $region114: #{trajectory_vae_forward.1} parent=101 // pred_fallthru
          _
        // Predicated region
        $region115: #{trajectory_vae_forward.1} parent=101 // pred_check
          %p1286 = pneg %p287
        $region116: #{trajectory_vae_forward.1} parent=101 // pred_check_branch
          %1288 = sbr.rel (%p1286) target = $region118
        $region117: #{trajectory_vae_forward.1} parent=101 // pred_region
          %s1289 = sand.u32 %s272, 1
          %s1290 = sand.u32 %s272, 1
          %s1291 = smul.addr %s1290, 16
          %s1292 = scalar_lea.vmem [#allocation6], %s1291
        $region118: #{trajectory_vae_forward.1} parent=101 // pred_fallthru
          _
      $region102: #{trajectory_vae_forward.1} parent=5 // pred_fallthru
        _
    $region6: #{trajectory_vae_forward.1} parent=1 // loop_footer
      %s27 = sadd.s32 1, %s23
    $region7: #{trajectory_vae_forward.1} parent=1 // loop_footer_branch
      %22 = sbr.rel target = $region3
    $region8: #{trajectory_vae_forward.1} parent=1 // loop_exit
      _
    %1293 = vsyncpa [#allocation3], 1
    %s1294 = scalar_lea.sflag [#allocation3], 1
    %1295 = vsyncpa %s1294, 1
    %1296 = vsyncpa [#allocation5], 1
    %s1297 = scalar_lea.sflag [#allocation5], 1
    %1298 = vsyncpa %s1297, 1

</llo_original>
